<compile_context>
chip_gen: v6e
topology: v6e:2x2x1
jax: 0.10.0
libtpu: 0.0.40
codegen_flags: <defaults>
</compile_context>

<pallas_src>
import functools

import jax
import jax.numpy as jnp
from jax.experimental import pallas as pl
from jax.experimental.pallas import tpu as pltpu


def _round_up(n, m):
    return ((n + m - 1) // m) * m


def _log_sigmoid(t):
    # Numerically safe log(sigmoid(t)) using only exp/log/abs/min (EUP-friendly).
    return jnp.minimum(t, 0.0) - jnp.log(1.0 + jnp.exp(-jnp.abs(t)))


def _block_terms(x_ref, w1_ref, b1_ref, wms_ref, bms_ref, wd1_ref, bd1_ref,
                 wd2_ref, bd2_ref, eps_ref, *, batch, block_b, z_live):
    """Run the VAE forward on one batch tile and return the (row-masked) per-element
    loss contributions:
      bce: (TB, D)      x*log(out) + (1-x)*log(1-out)   (negate & sum for l_recon)
      reg: (TB, Z_pad)  sigma^2 + mu^2 - 1 - log(sigma^2+eps)  (sum & *0.5 for l_reg)
    """
    eps_const = 1e-6
    i = pl.program_id(0)

    xb = x_ref[...]                              # (TB, D) bf16, streamed from HBM
    x = xb.astype(jnp.float32)                   # f32 only for the loss math

    # ---- Encoder ----
    h = jnp.dot(xb, w1_ref[...], preferred_element_type=jnp.float32) + b1_ref[...]
    h = jnp.maximum(h, 0.0)                      # ReLU

    # Fused mu|sigma head: one lane-dense matmul, sliced at the 128-lane boundary.
    ms = jnp.dot(h.astype(jnp.bfloat16), wms_ref[...],
                 preferred_element_type=jnp.float32) + bms_ref[...]
    z_pad = ms.shape[1] // 2
    p_mu = ms[:, :z_pad]
    p_sigma = jnp.maximum(ms[:, z_pad:], 0.0)    # ReLU (as in the reference)

    # ---- Reparameterization: z = epsilon * sigma + mu (epsilon shared over batch) ----
    z = eps_ref[...] * p_sigma + p_mu            # (TB, Z_pad)

    # ---- Decoder (logits; sigmoid folded into the BCE identity below) ----
    h2 = jnp.dot(z.astype(jnp.bfloat16), wd1_ref[...],
                 preferred_element_type=jnp.float32) + bd1_ref[...]
    h2 = jnp.maximum(h2, 0.0)
    logits = jnp.dot(h2.astype(jnp.bfloat16), wd2_ref[...],
                     preferred_element_type=jnp.float32) + bd2_ref[...]   # (TB, D)

    # x*log(sigmoid(l)) + (1-x)*log(1-sigmoid(l)) == log_sigmoid(l) - (1-x)*l
    bce = _log_sigmoid(logits) - (1.0 - x) * logits                        # (TB, D)

    # KL term; padded z columns have mu = sigma = 0 (zero-padded weights/biases) but
    # still contribute -1 - log(eps), so mask them out.
    sig2 = p_sigma * p_sigma
    col_z_mask = (jax.lax.broadcasted_iota(jnp.int32, (1, z_pad), 1)
                  < z_live).astype(jnp.float32)
    reg = (sig2 + p_mu * p_mu - 1.0 - jnp.log(sig2 + eps_const)) * col_z_mask

    if batch % block_b != 0:
        # Only compiled in when the wrapper padded the batch: padded (zero) x rows
        # still produce bias-driven logits / mu / sigma, so mask them out of the loss.
        row_ids = i * block_b + jax.lax.broadcasted_iota(jnp.int32, (block_b, 1), 0)
        row_mask = (row_ids < batch).astype(jnp.float32)
        bce = bce * row_mask
        reg = reg * row_mask
    return bce, reg


def vae_serial_kernel(x_ref, w1_ref, b1_ref, wms_ref, bms_ref, wd1_ref, bd1_ref,
                      wd2_ref, bd2_ref, eps_ref, out_ref, acc_d_ref, acc_z_ref,
                      *, batch, block_b, z_live):
    """Single-accumulator path ("arbitrary" batch axis, scratch carries partial sums)."""
    i = pl.program_id(0)

    @pl.when(i == 0)
    def _init():
        acc_d_ref[...] = jnp.zeros_like(acc_d_ref)
        acc_z_ref[...] = jnp.zeros_like(acc_z_ref)

    bce, reg = _block_terms(x_ref, w1_ref, b1_ref, wms_ref, bms_ref, wd1_ref,
                            bd1_ref, wd2_ref, bd2_ref, eps_ref,
                            batch=batch, block_b=block_b, z_live=z_live)

    # Per step: reduce over the batch (sublane) axis only (mostly VALU vreg adds);
    # the expensive cross-lane reduce happens once, in the finalize branch.
    acc_d_ref[...] += jnp.sum(bce, axis=0, keepdims=True)   # (1, D)
    acc_z_ref[...] += jnp.sum(reg, axis=0, keepdims=True)   # (1, Z_pad)

    @pl.when(i == pl.num_programs(0) - 1)
    def _finalize():
        total = -jnp.sum(acc_d_ref[...]) + 0.5 * jnp.sum(acc_z_ref[...])
        out_ref[...] = jnp.full((1, 1), total * (1.0 / batch), dtype=jnp.float32)


def vae_partial_kernel(x_ref, w1_ref, b1_ref, wms_ref, bms_ref, wd1_ref, bd1_ref,
                       wd2_ref, bd2_ref, eps_ref, out_ref,
                       *, batch, block_b, z_live):
    """Per-block partial-sum path ("parallel" batch axis; wrapper reduces).
    Lets both TensorCores work on v7x; equivalent (1 TC) elsewhere."""
    bce, reg = _block_terms(x_ref, w1_ref, b1_ref, wms_ref, bms_ref, wd1_ref,
                            bd1_ref, wd2_ref, bd2_ref, eps_ref,
                            batch=batch, block_b=block_b, z_live=z_live)
    partial = -jnp.sum(bce) + 0.5 * jnp.sum(reg)
    # Lane-dense (1, 8, 128) block write; wrapper reads [:, 0, 0].
    out_ref[...] = jnp.full(out_ref.shape, partial, dtype=jnp.float32)


def _pad2(a, rows, cols):
    return jnp.pad(a, ((0, rows - a.shape[0]), (0, cols - a.shape[1])))


def pack_params(params, epsilon):
    """Pad hidden / z dims to lane-friendly multiples of 128, fuse mu|sigma heads,
    cast matmul weights to bf16.  The image dim D=784 is NOT padded (x streams at its
    true width).  Padding is exactly zero -> padded mu/sigma/logit columns are exact."""
    w1, b1, wmu, bmu, wsig, bsig, wd1, bd1, wd2, bd2 = params
    D, H = w1.shape
    Z = wmu.shape[1]
    H_pad, Z_pad = _round_up(H, 128), _round_up(Z, 128)

    w1p = _pad2(w1, D, H_pad).astype(jnp.bfloat16)
    b1p = _pad2(b1, 1, H_pad).astype(jnp.float32)
    wmsp = jnp.concatenate([_pad2(wmu, H_pad, Z_pad),
                            _pad2(wsig, H_pad, Z_pad)], axis=1).astype(jnp.bfloat16)
    bmsp = jnp.concatenate([_pad2(bmu, 1, Z_pad),
                            _pad2(bsig, 1, Z_pad)], axis=1).astype(jnp.float32)
    wd1p = _pad2(wd1, Z_pad, H_pad).astype(jnp.bfloat16)
    bd1p = _pad2(bd1, 1, H_pad).astype(jnp.float32)
    wd2p = _pad2(wd2, H_pad, D).astype(jnp.bfloat16)
    bd2p = _pad2(bd2, 1, D).astype(jnp.float32)
    epsp = _pad2(epsilon.reshape(1, -1).astype(jnp.float32), 1, Z_pad)
    return (w1p, b1p, wmsp, bmsp, wd1p, bd1p, wd2p, bd2p, epsp), (D, Z, H_pad, Z_pad)


def _pick_vmem_limit():
    """~85% of physical VMEM, capped at 112 MiB (v5e/v6e); v7x-safe 54 MiB fallback."""
    try:
        cap = pltpu.get_tpu_info().vmem_capacity_bytes
    except Exception:
        cap = 64 * 1024 * 1024
    return min(int(cap * 0.85), 112 * 1024 * 1024)


def vae_forward(x_img, params, epsilon, *, block_b=512, partial_sums=False):
    """x_img: (B, 1, 28, 28) float32 NCHW.  Returns the scalar average negative ELBO.

    block_b: batch tile (rounded to 16, clamped to the batch).  256-1024 recommended
             on real batches; on v7x keep <=1024 so intermediates fit 64 MiB VMEM.
    partial_sums: per-block partial sums + "parallel" batch axis (v7x two-TC path).
    """
    B = x_img.shape[0]
    x = x_img.reshape(B, -1)                    # flatten(1, 3)
    packed, (D, Z, H_pad, Z_pad) = pack_params(params, epsilon)
    assert x.shape[1] == D

    # 16-row granularity (bf16 sublane packing); never bigger than the padded batch.
    block_b = max(16, min(_round_up(int(block_b), 16), _round_up(B, 16)))
    B_pad = _round_up(B, block_b)
    num_blocks = B_pad // block_b

    # Stream x as bf16 (half the HBM bytes); feature dim stays at the true D=784,
    # so no padded HBM copy of x is materialized.  Pad batch rows only if needed.
    x_bf16 = x.astype(jnp.bfloat16)
    if B_pad != B:
        x_bf16 = jnp.pad(x_bf16, ((0, B_pad - B), (0, 0)))

    def resident(p):
        return pl.BlockSpec(p.shape, lambda i: (0,) * p.ndim)   # VMEM-resident weights

    in_specs = [pl.BlockSpec((block_b, D), lambda i: (i, 0))]   # only streamed operand
    in_specs += [resident(p) for p in packed]

    vmem_limit = _pick_vmem_limit()

    if partial_sums:
        kernel = functools.partial(vae_partial_kernel, batch=B,
                                   block_b=block_b, z_live=Z)
        out = pl.pallas_call(
            kernel,
            out_shape=jax.ShapeDtypeStruct((num_blocks, 8, 128), jnp.float32),
            grid=(num_blocks,),
            in_specs=in_specs,
            out_specs=pl.BlockSpec((1, 8, 128), lambda i: (i, 0, 0)),
            compiler_params=pltpu.CompilerParams(
                dimension_semantics=("parallel",),
                vmem_limit_bytes=vmem_limit),
        )(x_bf16, *packed)
        return jnp.sum(out[:, 0, 0]) / B

    kernel = functools.partial(vae_serial_kernel, batch=B,
                               block_b=block_b, z_live=Z)
    out = pl.pallas_call(
        kernel,
        out_shape=jax.ShapeDtypeStruct((1, 1), jnp.float32),
        grid=(num_blocks,),
        in_specs=in_specs,
        out_specs=pl.BlockSpec((1, 1), lambda i: (0, 0)),
        scratch_shapes=[pltpu.VMEM((1, D), jnp.float32),       # per-lane bce accum
                        pltpu.VMEM((1, Z_pad), jnp.float32)],  # per-lane KL accum
        compiler_params=pltpu.CompilerParams(
            dimension_semantics=("arbitrary",),                # scratch carries accum
            vmem_limit_bytes=vmem_limit),
    )(x_bf16, *packed)
    return out[0, 0]


def init_params(key, input_dim, hidden_dim, z_dim):
    """Deterministic synthetic params.  Weights stored as (in_dim, out_dim)."""
    keys = jax.random.split(key, 10)
    s = 0.05  # small scale keeps sigmoid away from saturation
    w1   = jax.random.normal(keys[0], (input_dim, hidden_dim), jnp.float32) * s
    b1   = jax.random.normal(keys[1], (1, hidden_dim), jnp.float32) * s
    wmu  = jax.random.normal(keys[2], (hidden_dim, z_dim), jnp.float32) * s
    bmu  = jax.random.normal(keys[3], (1, z_dim), jnp.float32) * s
    wsig = jax.random.normal(keys[4], (hidden_dim, z_dim), jnp.float32) * s
    bsig = jax.random.normal(keys[5], (1, z_dim), jnp.float32) * s
    wd1  = jax.random.normal(keys[6], (z_dim, hidden_dim), jnp.float32) * s
    bd1  = jax.random.normal(keys[7], (1, hidden_dim), jnp.float32) * s
    wd2  = jax.random.normal(keys[8], (hidden_dim, input_dim), jnp.float32) * s
    bd2  = jax.random.normal(keys[9], (1, input_dim), jnp.float32) * s
    return (w1, b1, wmu, bmu, wsig, bsig, wd1, bd1, wd2, bd2)


def vae_forward_ref(x_img, params, epsilon):
    """Pure-JAX f32 reference of the PyTorch forward, for sanity checking."""
    B = x_img.shape[0]
    x = x_img.reshape(B, -1)
    (w1, b1, wmu, bmu, wsig, bsig, wd1, bd1, wd2, bd2) = params
    e = 1e-6
    h = jnp.maximum(x @ w1 + b1, 0.0)
    p_mu = h @ wmu + bmu
    p_sigma = jnp.maximum(h @ wsig + bsig, 0.0)
    z = epsilon.reshape(1, -1) * p_sigma + p_mu
    h2 = jnp.maximum(z @ wd1 + bd1, 0.0)
    out = jax.nn.sigmoid(h2 @ wd2 + bd2)
    l_recon = -jnp.sum(x * jnp.log(out + e) + (1.0 - x) * jnp.log(1.0 - out))
    l_reg = 0.5 * jnp.sum(p_sigma ** 2 + p_mu ** 2 - 1.0 - jnp.log(p_sigma ** 2 + e))
    return (l_recon + l_reg) / B


if __name__ == "__main__":
    H_img, W_img = 28, 28
    input_dim = H_img * W_img      # 784 (fixed by the module)
    hidden_dim = 32
    z_dim = 8

    key = jax.random.PRNGKey(0)
    k_x, k_eps, k_p = jax.random.split(key, 3)
    params = init_params(k_p, input_dim, hidden_dim, z_dim)
    epsilon = jax.random.normal(k_eps, (z_dim,), jnp.float32)   # torch.randn(z_dim)

    tol = dict(rtol=2e-2, atol=2.0)   # bf16 streaming of x + bf16 matmul weights

    # 1) Serial accumulator path; whole batch fits in one tile.
    B1 = 16
    x1 = jax.random.uniform(k_x, (B1, 1, H_img, W_img), jnp.float32)
    out1 = vae_forward(x1, params, epsilon)
    jax.block_until_ready(out1)
    ref1 = vae_forward_ref(x1, params, epsilon)
    assert jnp.allclose(out1, ref1, **tol), (float(out1), float(ref1))

    # 2) Serial path, multiple grid steps + batch-remainder row masking (B=20 -> pad 32).
    B2 = 20
    x2 = jax.random.uniform(jax.random.fold_in(k_x, 1), (B2, 1, H_img, W_img), jnp.float32)
    out2 = vae_forward(x2, params, epsilon, block_b=16)
    jax.block_until_ready(out2)
    ref2 = vae_forward_ref(x2, params, epsilon)
    assert jnp.allclose(out2, ref2, **tol), (float(out2), float(ref2))

    # 3) Per-block parallel partial sums (both-TensorCore path on v7x).
    B3 = 32
    x3 = jax.random.uniform(jax.random.fold_in(k_x, 2), (B3, 1, H_img, W_img), jnp.float32)
    out3 = vae_forward(x3, params, epsilon, block_b=16, partial_sums=True)
    jax.block_until_ready(out3)
    ref3 = vae_forward_ref(x3, params, epsilon)
    assert jnp.allclose(out3, ref3, **tol), (float(out3), float(ref3))

    print("KERNEL_OK")
</pallas_src>

<mosaic_0001>
module attributes {stable_mosaic.version = 11 : i64} {
  func.func @vae_serial_kernel(%arg0: i32, %arg1: memref<16x784xbf16, #tpu.memory_space<vmem>>, %arg2: memref<784x128xbf16, #tpu.memory_space<vmem>>, %arg3: memref<1x128xf32, #tpu.memory_space<vmem>>, %arg4: memref<128x256xbf16, #tpu.memory_space<vmem>>, %arg5: memref<1x256xf32, #tpu.memory_space<vmem>>, %arg6: memref<128x128xbf16, #tpu.memory_space<vmem>>, %arg7: memref<1x128xf32, #tpu.memory_space<vmem>>, %arg8: memref<128x784xbf16, #tpu.memory_space<vmem>>, %arg9: memref<1x784xf32, #tpu.memory_space<vmem>>, %arg10: memref<1x128xf32, #tpu.memory_space<vmem>>, %arg11: memref<1x1xf32, #tpu.memory_space<vmem>>, %arg12: memref<1x784xf32, #tpu.memory_space<vmem>>, %arg13: memref<1x128xf32, #tpu.memory_space<vmem>>) attributes {dimension_semantics = [#tpu.dimension_semantics<arbitrary>], iteration_bounds = array<i64: 1>, scalar_prefetch = 0 : i64, scratch_operands = 2 : i64, tpu.core_type = #tpu.core_type<tc>, window_params = [{transform_indices = @transform_0, window_bounds = array<i64: 16, 784>}, {pipeline_mode = #tpu.pipeline_mode<synchronous>, transform_indices = @transform_1, window_bounds = array<i64: 784, 128>}, {pipeline_mode = #tpu.pipeline_mode<synchronous>, transform_indices = @transform_2, window_bounds = array<i64: 1, 128>}, {pipeline_mode = #tpu.pipeline_mode<synchronous>, transform_indices = @transform_3, window_bounds = array<i64: 128, 256>}, {pipeline_mode = #tpu.pipeline_mode<synchronous>, transform_indices = @transform_4, window_bounds = array<i64: 1, 256>}, {pipeline_mode = #tpu.pipeline_mode<synchronous>, transform_indices = @transform_5, window_bounds = array<i64: 128, 128>}, {pipeline_mode = #tpu.pipeline_mode<synchronous>, transform_indices = @transform_6, window_bounds = array<i64: 1, 128>}, {pipeline_mode = #tpu.pipeline_mode<synchronous>, transform_indices = @transform_7, window_bounds = array<i64: 128, 784>}, {pipeline_mode = #tpu.pipeline_mode<synchronous>, transform_indices = @transform_8, window_bounds = array<i64: 1, 784>}, {pipeline_mode = #tpu.pipeline_mode<synchronous>, transform_indices = @transform_9, window_bounds = array<i64: 1, 128>}, {pipeline_mode = #tpu.pipeline_mode<synchronous>, transform_indices = @transform_10, window_bounds = array<i64: 1, 1>}]} {
    %c0_i32 = arith.constant 0 : i32
    %0 = arith.cmpi eq, %arg0, %c0_i32 : i32
    %1 = arith.extui %0 : i1 to i32
    %c0_i32_0 = arith.constant 0 : i32
    %2 = arith.cmpi ne, %1, %c0_i32_0 : i32
    scf.if %2 {
      %cst_44 = arith.constant 0.000000e+00 : f32
      %83 = vector.broadcast %cst_44 : f32 to vector<1x784xf32>
      %c0_45 = arith.constant 0 : index
      %c0_46 = arith.constant 0 : index
      %84 = vector.load %arg12[%c0_45, %c0_46] : memref<1x784xf32, #tpu.memory_space<vmem>>, vector<1x784xf32>
      tpu.vector_store %arg12[%c0_45, %c0_46], %83 {strides = array<i32>} : memref<1x784xf32, #tpu.memory_space<vmem>>, vector<1x784xf32>,
      %cst_47 = arith.constant 0.000000e+00 : f32
      %85 = vector.broadcast %cst_47 : f32 to vector<1x128xf32>
      %c0_48 = arith.constant 0 : index
      %c0_49 = arith.constant 0 : index
      %86 = vector.load %arg13[%c0_48, %c0_49] : memref<1x128xf32, #tpu.memory_space<vmem>>, vector<1x128xf32>
      tpu.vector_store %arg13[%c0_48, %c0_49], %85 {strides = array<i32>} : memref<1x128xf32, #tpu.memory_space<vmem>>, vector<1x128xf32>,
    } else {
    }
    %c0 = arith.constant 0 : index
    %c0_1 = arith.constant 0 : index
    %3 = vector.load %arg1[%c0, %c0_1] : memref<16x784xbf16, #tpu.memory_space<vmem>>, vector<16x784xbf16>
    %4 = arith.extf %3 : vector<16x784xbf16> to vector<16x784xf32>
    %c0_2 = arith.constant 0 : index
    %c0_3 = arith.constant 0 : index
    %5 = vector.load %arg2[%c0_2, %c0_3] : memref<784x128xbf16, #tpu.memory_space<vmem>>, vector<784x128xbf16>
    %cst = arith.constant dense<0.000000e+00> : vector<16x128xf32>
    %6 = tpu.matmul %3, %5, %cst {dimension_numbers = #tpu.dot_dimension_numbers<[1], [0], [0], [1], [0, 0, 1, 1], [], []>} : vector<16x784xbf16>, vector<784x128xbf16>, vector<16x128xf32> -> vector<16x128xf32>
    %c0_4 = arith.constant 0 : index
    %c0_5 = arith.constant 0 : index
    %7 = vector.load %arg3[%c0_4, %c0_5] : memref<1x128xf32, #tpu.memory_space<vmem>>, vector<1x128xf32>
    %8 = vector.broadcast %7 : vector<1x128xf32> to vector<16x128xf32>
    %9 = arith.addf %6, %8 : vector<16x128xf32>
    %cst_6 = arith.constant 0.000000e+00 : f32
    %10 = vector.broadcast %cst_6 : f32 to vector<16x128xf32>
    %11 = arith.maximumf %9, %10 : vector<16x128xf32>
    %12 = arith.truncf %11 : vector<16x128xf32> to vector<16x128xbf16>
    %c0_7 = arith.constant 0 : index
    %c0_8 = arith.constant 0 : index
    %13 = vector.load %arg4[%c0_7, %c0_8] : memref<128x256xbf16, #tpu.memory_space<vmem>>, vector<128x256xbf16>
    %cst_9 = arith.constant dense<0.000000e+00> : vector<16x256xf32>
    %14 = tpu.matmul %12, %13, %cst_9 {dimension_numbers = #tpu.dot_dimension_numbers<[1], [0], [0], [1], [0, 0, 1, 1], [], []>} : vector<16x128xbf16>, vector<128x256xbf16>, vector<16x256xf32> -> vector<16x256xf32>
    %c0_10 = arith.constant 0 : index
    %c0_11 = arith.constant 0 : index
    %15 = vector.load %arg5[%c0_10, %c0_11] : memref<1x256xf32, #tpu.memory_space<vmem>>, vector<1x256xf32>
    %16 = vector.broadcast %15 : vector<1x256xf32> to vector<16x256xf32>
    %17 = arith.addf %14, %16 : vector<16x256xf32>
    %18 = vector.extract_strided_slice %17 {offsets = [0, 0], sizes = [16, 128], strides = [1, 1]} : vector<16x256xf32> to vector<16x128xf32>
    %19 = vector.extract_strided_slice %17 {offsets = [0, 128], sizes = [16, 128], strides = [1, 1]} : vector<16x256xf32> to vector<16x128xf32>
    %cst_12 = arith.constant 0.000000e+00 : f32
    %20 = vector.broadcast %cst_12 : f32 to vector<16x128xf32>
    %21 = arith.maximumf %19, %20 : vector<16x128xf32>
    %c0_13 = arith.constant 0 : index
    %c0_14 = arith.constant 0 : index
    %22 = vector.load %arg10[%c0_13, %c0_14] : memref<1x128xf32, #tpu.memory_space<vmem>>, vector<1x128xf32>
    %23 = vector.broadcast %22 : vector<1x128xf32> to vector<16x128xf32>
    %24 = arith.mulf %23, %21 : vector<16x128xf32>
    %25 = arith.addf %24, %18 : vector<16x128xf32>
    %26 = arith.truncf %25 : vector<16x128xf32> to vector<16x128xbf16>
    %c0_15 = arith.constant 0 : index
    %c0_16 = arith.constant 0 : index
    %27 = vector.load %arg6[%c0_15, %c0_16] : memref<128x128xbf16, #tpu.memory_space<vmem>>, vector<128x128xbf16>
    %cst_17 = arith.constant dense<0.000000e+00> : vector<16x128xf32>
    %28 = tpu.matmul %26, %27, %cst_17 {dimension_numbers = #tpu.dot_dimension_numbers<[1], [0], [0], [1], [0, 0, 1, 1], [], []>} : vector<16x128xbf16>, vector<128x128xbf16>, vector<16x128xf32> -> vector<16x128xf32>
    %c0_18 = arith.constant 0 : index
    %c0_19 = arith.constant 0 : index
    %29 = vector.load %arg7[%c0_18, %c0_19] : memref<1x128xf32, #tpu.memory_space<vmem>>, vector<1x128xf32>
    %30 = vector.broadcast %29 : vector<1x128xf32> to vector<16x128xf32>
    %31 = arith.addf %28, %30 : vector<16x128xf32>
    %cst_20 = arith.constant 0.000000e+00 : f32
    %32 = vector.broadcast %cst_20 : f32 to vector<16x128xf32>
    %33 = arith.maximumf %31, %32 : vector<16x128xf32>
    %34 = arith.truncf %33 : vector<16x128xf32> to vector<16x128xbf16>
    %c0_21 = arith.constant 0 : index
    %c0_22 = arith.constant 0 : index
    %35 = vector.load %arg8[%c0_21, %c0_22] : memref<128x784xbf16, #tpu.memory_space<vmem>>, vector<128x784xbf16>
    %cst_23 = arith.constant dense<0.000000e+00> : vector<16x784xf32>
    %36 = tpu.matmul %34, %35, %cst_23 {dimension_numbers = #tpu.dot_dimension_numbers<[1], [0], [0], [1], [0, 0, 1, 1], [], []>} : vector<16x128xbf16>, vector<128x784xbf16>, vector<16x784xf32> -> vector<16x784xf32>
    %c0_24 = arith.constant 0 : index
    %c0_25 = arith.constant 0 : index
    %37 = vector.load %arg9[%c0_24, %c0_25] : memref<1x784xf32, #tpu.memory_space<vmem>>, vector<1x784xf32>
    %38 = vector.broadcast %37 : vector<1x784xf32> to vector<16x784xf32>
    %39 = arith.addf %36, %38 : vector<16x784xf32>
    %cst_26 = arith.constant 0.000000e+00 : f32
    %40 = vector.broadcast %cst_26 : f32 to vector<16x784xf32>
    %41 = arith.minimumf %39, %40 : vector<16x784xf32>
    %42 = math.absf %39 : vector<16x784xf32>
    %cst_27 = arith.constant 0.000000e+00 : f32
    %43 = vector.broadcast %cst_27 : f32 to vector<16x784xf32>
    %44 = arith.subf %43, %42 : vector<16x784xf32>
    %45 = math.exp %44 : vector<16x784xf32>
    %cst_28 = arith.constant 1.000000e+00 : f32
    %46 = vector.broadcast %cst_28 : f32 to vector<16x784xf32>
    %47 = arith.addf %46, %45 : vector<16x784xf32>
    %48 = math.log %47 : vector<16x784xf32>
    %49 = arith.subf %41, %48 : vector<16x784xf32>
    %cst_29 = arith.constant 1.000000e+00 : f32
    %50 = vector.broadcast %cst_29 : f32 to vector<16x784xf32>
    %51 = arith.subf %50, %4 : vector<16x784xf32>
    %52 = arith.mulf %51, %39 : vector<16x784xf32>
    %53 = arith.subf %49, %52 : vector<16x784xf32>
    %54 = arith.mulf %21, %21 : vector<16x128xf32>
    %55 = tpu.iota {dimensions = array<i32: 1>} : vector<1x128xi32>
    %c8_i32 = arith.constant 8 : i32
    %56 = vector.broadcast %c8_i32 : i32 to vector<1x128xi32>
    %57 = arith.cmpi slt, %55, %56 : vector<1x128xi32>
    %58 = arith.extui %57 : vector<1x128xi1> to vector<1x128xi32>
    %59 = arith.sitofp %58 : vector<1x128xi32> to vector<1x128xf32>
    %60 = arith.mulf %18, %18 : vector<16x128xf32>
    %61 = arith.addf %54, %60 : vector<16x128xf32>
    %cst_30 = arith.constant 1.000000e+00 : f32
    %62 = vector.broadcast %cst_30 : f32 to vector<16x128xf32>
    %63 = arith.subf %61, %62 : vector<16x128xf32>
    %cst_31 = arith.constant 9.99999997E-7 : f32
    %64 = vector.broadcast %cst_31 : f32 to vector<16x128xf32>
    %65 = arith.addf %54, %64 : vector<16x128xf32>
    %66 = math.log %65 : vector<16x128xf32>
    %67 = arith.subf %63, %66 : vector<16x128xf32>
    %68 = vector.broadcast %59 : vector<1x128xf32> to vector<16x128xf32>
    %69 = arith.mulf %67, %68 : vector<16x128xf32>
    %c0_32 = arith.constant 0 : index
    %c0_33 = arith.constant 0 : index
    %70 = vector.load %arg12[%c0_32, %c0_33] : memref<1x784xf32, #tpu.memory_space<vmem>>, vector<1x784xf32>
    %cst_34 = arith.constant dense<0.000000e+00> : vector<784xf32>
    %71 = vector.multi_reduction <add>, %53, %cst_34 [0] : vector<16x784xf32> to vector<784xf32>
    %72 = vector.shape_cast %71 : vector<784xf32> to vector<1x784xf32>
    %73 = arith.addf %70, %72 : vector<1x784xf32>
    %c0_35 = arith.constant 0 : index
    %c0_36 = arith.constant 0 : index
    %74 = vector.load %arg12[%c0_35, %c0_36] : memref<1x784xf32, #tpu.memory_space<vmem>>, vector<1x784xf32>
    tpu.vector_store %arg12[%c0_35, %c0_36], %73 {strides = array<i32>} : memref<1x784xf32, #tpu.memory_space<vmem>>, vector<1x784xf32>,
    %c0_37 = arith.constant 0 : index
    %c0_38 = arith.constant 0 : index
    %75 = vector.load %arg13[%c0_37, %c0_38] : memref<1x128xf32, #tpu.memory_space<vmem>>, vector<1x128xf32>
    %cst_39 = arith.constant dense<0.000000e+00> : vector<128xf32>
    %76 = vector.multi_reduction <add>, %69, %cst_39 [0] : vector<16x128xf32> to vector<128xf32>
    %77 = vector.shape_cast %76 : vector<128xf32> to vector<1x128xf32>
    %78 = arith.addf %75, %77 : vector<1x128xf32>
    %c0_40 = arith.constant 0 : index
    %c0_41 = arith.constant 0 : index
    %79 = vector.load %arg13[%c0_40, %c0_41] : memref<1x128xf32, #tpu.memory_space<vmem>>, vector<1x128xf32>
    tpu.vector_store %arg13[%c0_40, %c0_41], %78 {strides = array<i32>} : memref<1x128xf32, #tpu.memory_space<vmem>>, vector<1x128xf32>,
    %c0_i32_42 = arith.constant 0 : i32
    %80 = arith.cmpi eq, %arg0, %c0_i32_42 : i32
    %81 = arith.extui %80 : i1 to i32
    %c0_i32_43 = arith.constant 0 : i32
    %82 = arith.cmpi ne, %81, %c0_i32_43 : i32
    scf.if %82 {
      %c0_44 = arith.constant 0 : index
      %c0_45 = arith.constant 0 : index
      %83 = vector.load %arg12[%c0_44, %c0_45] : memref<1x784xf32, #tpu.memory_space<vmem>>, vector<1x784xf32>
      %84 = vector.shape_cast %83 : vector<1x784xf32> to vector<1x1x784xf32>
      %cst_46 = arith.constant dense<0.000000e+00> : vector<1xf32>
      %85 = vector.multi_reduction <add>, %84, %cst_46 [1, 2] : vector<1x1x784xf32> to vector<1xf32>
      %86 = vector.shape_cast %85 : vector<1xf32> to vector<1x1x1xf32>
      %87 = vector.extract %86[0, 0, 0] : f32 from vector<1x1x1xf32>
      %cst_47 = arith.constant 0.000000e+00 : f32
      %88 = arith.subf %cst_47, %87 : f32
      %c0_48 = arith.constant 0 : index
      %c0_49 = arith.constant 0 : index
      %89 = vector.load %arg13[%c0_48, %c0_49] : memref<1x128xf32, #tpu.memory_space<vmem>>, vector<1x128xf32>
      %90 = vector.shape_cast %89 : vector<1x128xf32> to vector<1x1x128xf32>
      %cst_50 = arith.constant dense<0.000000e+00> : vector<1xf32>
      %91 = vector.multi_reduction <add>, %90, %cst_50 [1, 2] : vector<1x1x128xf32> to vector<1xf32>
      %92 = vector.shape_cast %91 : vector<1xf32> to vector<1x1x1xf32>
      %93 = vector.extract %92[0, 0, 0] : f32 from vector<1x1x1xf32>
      %cst_51 = arith.constant 5.000000e-01 : f32
      %94 = arith.mulf %cst_51, %93 : f32
      %95 = arith.addf %88, %94 : f32
      %cst_52 = arith.constant 6.250000e-02 : f32
      %96 = arith.mulf %95, %cst_52 : f32
      %97 = vector.broadcast %96 : f32 to vector<1x1xf32>
      %c0_53 = arith.constant 0 : index
      %c0_54 = arith.constant 0 : index
      %98 = vector.load %arg11[%c0_53, %c0_54] : memref<1x1xf32, #tpu.memory_space<vmem>>, vector<1x1xf32>
      tpu.vector_store %arg11[%c0_53, %c0_54], %97 {strides = array<i32>} : memref<1x1xf32, #tpu.memory_space<vmem>>, vector<1x1xf32>,
    } else {
    }
    return
  }
  func.func @transform_0(%arg0: i32) -> (i32, i32) {
    %c0_i32 = arith.constant 0 : i32
    %c0_i32_0 = arith.constant 0 : i32
    return %arg0, %c0_i32 : i32, i32
  }
  func.func @transform_1(%arg0: i32) -> (i32, i32) {
    %c0_i32 = arith.constant 0 : i32
    %c0_i32_0 = arith.constant 0 : i32
    %c0_i32_1 = arith.constant 0 : i32
    return %c0_i32, %c0_i32_0 : i32, i32
  }
  func.func @transform_2(%arg0: i32) -> (i32, i32) {
    %c0_i32 = arith.constant 0 : i32
    %c0_i32_0 = arith.constant 0 : i32
    %c0_i32_1 = arith.constant 0 : i32
    return %c0_i32, %c0_i32_0 : i32, i32
  }
  func.func @transform_3(%arg0: i32) -> (i32, i32) {
    %c0_i32 = arith.constant 0 : i32
    %c0_i32_0 = arith.constant 0 : i32
    %c0_i32_1 = arith.constant 0 : i32
    return %c0_i32, %c0_i32_0 : i32, i32
  }
  func.func @transform_4(%arg0: i32) -> (i32, i32) {
    %c0_i32 = arith.constant 0 : i32
    %c0_i32_0 = arith.constant 0 : i32
    %c0_i32_1 = arith.constant 0 : i32
    return %c0_i32, %c0_i32_0 : i32, i32
  }
  func.func @transform_5(%arg0: i32) -> (i32, i32) {
    %c0_i32 = arith.constant 0 : i32
    %c0_i32_0 = arith.constant 0 : i32
    %c0_i32_1 = arith.constant 0 : i32
    return %c0_i32, %c0_i32_0 : i32, i32
  }
  func.func @transform_6(%arg0: i32) -> (i32, i32) {
    %c0_i32 = arith.constant 0 : i32
    %c0_i32_0 = arith.constant 0 : i32
    %c0_i32_1 = arith.constant 0 : i32
    return %c0_i32, %c0_i32_0 : i32, i32
  }
  func.func @transform_7(%arg0: i32) -> (i32, i32) {
    %c0_i32 = arith.constant 0 : i32
    %c0_i32_0 = arith.constant 0 : i32
    %c0_i32_1 = arith.constant 0 : i32
    return %c0_i32, %c0_i32_0 : i32, i32
  }
  func.func @transform_8(%arg0: i32) -> (i32, i32) {
    %c0_i32 = arith.constant 0 : i32
    %c0_i32_0 = arith.constant 0 : i32
    %c0_i32_1 = arith.constant 0 : i32
    return %c0_i32, %c0_i32_0 : i32, i32
  }
  func.func @transform_9(%arg0: i32) -> (i32, i32) {
    %c0_i32 = arith.constant 0 : i32
    %c0_i32_0 = arith.constant 0 : i32
    %c0_i32_1 = arith.constant 0 : i32
    return %c0_i32, %c0_i32_0 : i32, i32
  }
  func.func @transform_10(%arg0: i32) -> (i32, i32) {
    %c0_i32 = arith.constant 0 : i32
    %c0_i32_0 = arith.constant 0 : i32
    %c0_i32_1 = arith.constant 0 : i32
    return %c0_i32, %c0_i32_0 : i32, i32
  }
}

</mosaic_0001>

<llo_original>
// kernel: tpu_custom_call.1
$region0: #{tpu_custom_call.1}
  #allocation0 [shape = 'u32[]', space=smem, size = 0x4, offset = 0x4, fixed_abs, tag = 'smem constant byte address 0x4 - core index']
  #allocation1 [shape = 'u32[144,128]{1,0:T(1,128)}', space=vmem, size = 0x12000, scoped, tag = 'internal scratch']
  #allocation2 [shape = 'f32[1,784]{1,0:T(1,128)}', space=vmem, size = 0xe00, scoped, tag = 'scratch operand']
  #allocation3 [shape = 'f32[1,128]{1,0:T(1,128)}', space=vmem, size = 0x200, scoped, tag = 'scratch operand']
  %s0 = inlined_call_operand.vmem [shape: bf16[16,784], index: 0, kind: input, shape index: {}]
  %s1 = inlined_call_operand.vmem [shape: bf16[784,128], index: 1, kind: input, shape index: {}]
  %s2 = inlined_call_operand.vmem [shape: f32[1,128], index: 2, kind: input, shape index: {}]
  %s3 = inlined_call_operand.vmem [shape: bf16[128,256], index: 3, kind: input, shape index: {}]
  %s4 = inlined_call_operand.vmem [shape: f32[1,256], index: 4, kind: input, shape index: {}]
  %s5 = inlined_call_operand.vmem [shape: bf16[128,128], index: 5, kind: input, shape index: {}]
  %s6 = inlined_call_operand.vmem [shape: f32[1,128], index: 6, kind: input, shape index: {}]
  %s7 = inlined_call_operand.vmem [shape: bf16[128,784], index: 7, kind: input, shape index: {}]
  %s8 = inlined_call_operand.vmem [shape: f32[1,784], index: 8, kind: input, shape index: {}]
  %s9 = inlined_call_operand.vmem [shape: f32[1,128], index: 9, kind: input, shape index: {}]
  %s10 = inlined_call_operand.hbm [shape: f32[1,1], index: 10, kind: output, shape index: {}]
  %s11 = sld [smem:[#allocation0]]
  $region58: #{tpu_custom_call.1} parent=0
    _
  %s13 = ssub.s32 1, %s11
  %s14 = scalar_select 0, %s13, %s11
  $region1: #{tpu_custom_call.1} parent=0
    #allocation4 [shape = 'u8[512]{0}', space=vmem, size = 0x400, scoped, tag = 'output window, operand 0, single buffered']
    #allocation5 [shape = 's32[1]{0}', space=sflag, size = 0x4, scoped, tag = 'scoped memory for tpu_custom_call.1']
    %15 = vsyncpa [#allocation5], 0
    // Predicated region
    $region2: #{tpu_custom_call.1} parent=1 // pred_check
      _
    $region3: #{tpu_custom_call.1} parent=1 // pred_check_branch
      %17 = sbr.rel (0) target = $region5
    $region4: #{tpu_custom_call.1} parent=1 // pred_region
      _
    $region5: #{tpu_custom_call.1} parent=1 // pred_fallthru
      _
    // Predicated region
    $region6: #{tpu_custom_call.1} parent=1 // pred_check
      _
    $region7: #{tpu_custom_call.1} parent=1 // pred_check_branch
      %19 = sbr.rel (0) target = $region9
    $region8: #{tpu_custom_call.1} parent=1 // pred_region
      _
    $region9: #{tpu_custom_call.1} parent=1 // pred_fallthru
      _
    // Predicated region
    $region10: #{tpu_custom_call.1} parent=1 // pred_check
      _
    $region11: #{tpu_custom_call.1} parent=1 // pred_check_branch
      %21 = sbr.rel (0) target = $region13
    $region12: #{tpu_custom_call.1} parent=1 // pred_region
      _
    $region13: #{tpu_custom_call.1} parent=1 // pred_fallthru
      _
    // Predicated region
    $region14: #{tpu_custom_call.1} parent=1 // pred_check
      _
    $region15: #{tpu_custom_call.1} parent=1 // pred_check_branch
      %23 = sbr.rel (0) target = $region17
    $region16: #{tpu_custom_call.1} parent=1 // pred_region
      _
    $region17: #{tpu_custom_call.1} parent=1 // pred_fallthru
      _
    // Predicated region
    $region18: #{tpu_custom_call.1} parent=1 // pred_check
      _
    $region19: #{tpu_custom_call.1} parent=1 // pred_check_branch
      %25 = sbr.rel (0) target = $region21
    $region20: #{tpu_custom_call.1} parent=1 // pred_region
      _
    $region21: #{tpu_custom_call.1} parent=1 // pred_fallthru
      _
    // Predicated region
    $region22: #{tpu_custom_call.1} parent=1 // pred_check
      _
    $region23: #{tpu_custom_call.1} parent=1 // pred_check_branch
      %27 = sbr.rel (0) target = $region25
    $region24: #{tpu_custom_call.1} parent=1 // pred_region
      _
    $region25: #{tpu_custom_call.1} parent=1 // pred_fallthru
      _
    // Predicated region
    $region26: #{tpu_custom_call.1} parent=1 // pred_check
      _
    $region27: #{tpu_custom_call.1} parent=1 // pred_check_branch
      %29 = sbr.rel (0) target = $region29
    $region28: #{tpu_custom_call.1} parent=1 // pred_region
      _
    $region29: #{tpu_custom_call.1} parent=1 // pred_fallthru
      _
    // Predicated region
    $region30: #{tpu_custom_call.1} parent=1 // pred_check
      _
    $region31: #{tpu_custom_call.1} parent=1 // pred_check_branch
      %31 = sbr.rel (0) target = $region33
    $region32: #{tpu_custom_call.1} parent=1 // pred_region
      _
    $region33: #{tpu_custom_call.1} parent=1 // pred_fallthru
      _
    // Predicated region
    $region34: #{tpu_custom_call.1} parent=1 // pred_check
      _
    $region35: #{tpu_custom_call.1} parent=1 // pred_check_branch
      %33 = sbr.rel (0) target = $region37
    $region36: #{tpu_custom_call.1} parent=1 // pred_region
      _
    $region37: #{tpu_custom_call.1} parent=1 // pred_fallthru
      _
    // Predicated region
    $region38: #{tpu_custom_call.1} parent=1 // pred_check
      _
    $region39: #{tpu_custom_call.1} parent=1 // pred_check_branch
      %35 = sbr.rel (0) target = $region41
    $region40: #{tpu_custom_call.1} parent=1 // pred_region
      _
    $region41: #{tpu_custom_call.1} parent=1 // pred_fallthru
      _
    %p37 = scmp.eq.s32.totalorder 0, 0
    // Predicated region
    $region42: #{tpu_custom_call.1} parent=1 // pred_check
      %p38 = pneg %p37
    $region43: #{tpu_custom_call.1} parent=1 // pred_check_branch
      %40 = sbr.rel (%p38) target = $region45
    $region44: #{tpu_custom_call.1} parent=1 // pred_region
      %v41 = vlaneseq
      %vm42 = vcmp.ge.s32.totalorder %v41, 0
      %vm43 = vcmp.lt.s32.totalorder %v41, 784
      %vm44 = vmand %vm42, %vm43
      %45 = vst.msk [vmem:[#allocation2] sm:$0x7f] %vm44, 0.0
      %46 = vst [vmem:[#allocation3] sm:$0x1] 0.0
    $region45: #{tpu_custom_call.1} parent=1 // pred_fallthru
      _
    %v47 = vld [vmem:[%s0] sm:$0xff]
    %v48 = vld [vmem:[%s0 + $0x8] sm:$0xff]
    %v49 = vld [vmem:[%s0 + $0x10] sm:$0xff]
    %v50 = vld [vmem:[%s0 + $0x18] sm:$0xf]
    %v51 = vld [vmem:[%s0 + $0x1c] sm:$0xff]
    %v52 = vld [vmem:[%s0 + $0x24] sm:$0xff]
    %v53 = vld [vmem:[%s0 + $0x2c] sm:$0xff]
    %v54 = vld [vmem:[%s0 + $0x34] sm:$0xf]
    %v55 = vunpack.c.l.bf16 %v47
    %v56 = vunpack.c.h.bf16 %v47
    %v57 = vunpack.c.l.bf16 %v48
    %v58 = vunpack.c.h.bf16 %v48
    %v59 = vunpack.c.l.bf16 %v49
    %v60 = vunpack.c.h.bf16 %v49
    %v61 = vunpack.c.l.bf16 %v50
    %v62 = vunpack.c.l.bf16 %v51
    %v63 = vunpack.c.h.bf16 %v51
    %v64 = vunpack.c.l.bf16 %v52
    %v65 = vunpack.c.h.bf16 %v52
    %v66 = vunpack.c.l.bf16 %v53
    %v67 = vunpack.c.h.bf16 %v53
    %v68 = vunpack.c.l.bf16 %v54
    %v69 = vld [vmem:[%s1] sm:$0xf]
    %v70 = vld [vmem:[%s1 + $0x4] sm:$0xf]
    %v71 = vld [vmem:[%s1 + $0x8] sm:$0xf]
    %v72 = vld [vmem:[%s1 + $0xc] sm:$0xf]
    %v73 = vld [vmem:[%s1 + $0x10] sm:$0xf]
    %v74 = vld [vmem:[%s1 + $0x14] sm:$0xf]
    %v75 = vld [vmem:[%s1 + $0x18] sm:$0xf]
    %v76 = vld [vmem:[%s1 + $0x1c] sm:$0xf]
    %v77 = vld [vmem:[%s1 + $0x20] sm:$0xf]
    %v78 = vld [vmem:[%s1 + $0x24] sm:$0xf]
    %v79 = vld [vmem:[%s1 + $0x28] sm:$0xf]
    %v80 = vld [vmem:[%s1 + $0x2c] sm:$0xf]
    %v81 = vld [vmem:[%s1 + $0x30] sm:$0xf]
    %v82 = vld [vmem:[%s1 + $0x34] sm:$0xf]
    %v83 = vld [vmem:[%s1 + $0x38] sm:$0xf]
    %v84 = vld [vmem:[%s1 + $0x3c] sm:$0xf]
    %v85 = vld [vmem:[%s1 + $0x40] sm:$0xf]
    %v86 = vld [vmem:[%s1 + $0x44] sm:$0xf]
    %v87 = vld [vmem:[%s1 + $0x48] sm:$0xf]
    %v88 = vld [vmem:[%s1 + $0x4c] sm:$0xf]
    %v89 = vld [vmem:[%s1 + $0x50] sm:$0xf]
    %v90 = vld [vmem:[%s1 + $0x54] sm:$0xf]
    %v91 = vld [vmem:[%s1 + $0x58] sm:$0xf]
    %v92 = vld [vmem:[%s1 + $0x5c] sm:$0xf]
    %v93 = vld [vmem:[%s1 + $0x60] sm:$0xf]
    %v94 = vld [vmem:[%s1 + $0x64] sm:$0xf]
    %v95 = vld [vmem:[%s1 + $0x68] sm:$0xf]
    %v96 = vld [vmem:[%s1 + $0x6c] sm:$0xf]
    %v97 = vld [vmem:[%s1 + $0x70] sm:$0xf]
    %v98 = vld [vmem:[%s1 + $0x74] sm:$0xf]
    %v99 = vld [vmem:[%s1 + $0x78] sm:$0xf]
    %v100 = vld [vmem:[%s1 + $0x7c] sm:$0xf]
    %v101 = vld [vmem:[%s1 + $0x80] sm:$0xf]
    %v102 = vld [vmem:[%s1 + $0x84] sm:$0xf]
    %v103 = vld [vmem:[%s1 + $0x88] sm:$0xf]
    %v104 = vld [vmem:[%s1 + $0x8c] sm:$0xf]
    %v105 = vld [vmem:[%s1 + $0x90] sm:$0xf]
    %v106 = vld [vmem:[%s1 + $0x94] sm:$0xf]
    %v107 = vld [vmem:[%s1 + $0x98] sm:$0xf]
    %v108 = vld [vmem:[%s1 + $0x9c] sm:$0xf]
    %v109 = vld [vmem:[%s1 + $0xa0] sm:$0xf]
    %v110 = vld [vmem:[%s1 + $0xa4] sm:$0xf]
    %v111 = vld [vmem:[%s1 + $0xa8] sm:$0xf]
    %v112 = vld [vmem:[%s1 + $0xac] sm:$0xf]
    %v113 = vld [vmem:[%s1 + $0xb0] sm:$0xf]
    %v114 = vld [vmem:[%s1 + $0xb4] sm:$0xf]
    %v115 = vld [vmem:[%s1 + $0xb8] sm:$0xf]
    %v116 = vld [vmem:[%s1 + $0xbc] sm:$0xf]
    %v117 = vld [vmem:[%s1 + $0xc0] sm:$0xf]
    %v118 = vld [vmem:[%s1 + $0xc4] sm:$0xf]
    %v119 = vld [vmem:[%s1 + $0xc8] sm:$0xf]
    %v120 = vld [vmem:[%s1 + $0xcc] sm:$0xf]
    %v121 = vld [vmem:[%s1 + $0xd0] sm:$0xf]
    %v122 = vld [vmem:[%s1 + $0xd4] sm:$0xf]
    %v123 = vld [vmem:[%s1 + $0xd8] sm:$0xf]
    %v124 = vld [vmem:[%s1 + $0xdc] sm:$0xf]
    %v125 = vld [vmem:[%s1 + $0xe0] sm:$0xf]
    %v126 = vld [vmem:[%s1 + $0xe4] sm:$0xf]
    %v127 = vld [vmem:[%s1 + $0xe8] sm:$0xf]
    %v128 = vld [vmem:[%s1 + $0xec] sm:$0xf]
    %v129 = vld [vmem:[%s1 + $0xf0] sm:$0xf]
    %v130 = vld [vmem:[%s1 + $0xf4] sm:$0xf]
    %v131 = vld [vmem:[%s1 + $0xf8] sm:$0xf]
    %v132 = vld [vmem:[%s1 + $0xfc] sm:$0xf]
    %v133 = vld [vmem:[%s1 + $0x100] sm:$0xf]
    %v134 = vld [vmem:[%s1 + $0x104] sm:$0xf]
    %v135 = vld [vmem:[%s1 + $0x108] sm:$0xf]
    %v136 = vld [vmem:[%s1 + $0x10c] sm:$0xf]
    %v137 = vld [vmem:[%s1 + $0x110] sm:$0xf]
    %v138 = vld [vmem:[%s1 + $0x114] sm:$0xf]
    %v139 = vld [vmem:[%s1 + $0x118] sm:$0xf]
    %v140 = vld [vmem:[%s1 + $0x11c] sm:$0xf]
    %v141 = vld [vmem:[%s1 + $0x120] sm:$0xf]
    %v142 = vld [vmem:[%s1 + $0x124] sm:$0xf]
    %v143 = vld [vmem:[%s1 + $0x128] sm:$0xf]
    %v144 = vld [vmem:[%s1 + $0x12c] sm:$0xf]
    %v145 = vld [vmem:[%s1 + $0x130] sm:$0xf]
    %v146 = vld [vmem:[%s1 + $0x134] sm:$0xf]
    %v147 = vld [vmem:[%s1 + $0x138] sm:$0xf]
    %v148 = vld [vmem:[%s1 + $0x13c] sm:$0xf]
    %v149 = vld [vmem:[%s1 + $0x140] sm:$0xf]
    %v150 = vld [vmem:[%s1 + $0x144] sm:$0xf]
    %v151 = vld [vmem:[%s1 + $0x148] sm:$0xf]
    %v152 = vld [vmem:[%s1 + $0x14c] sm:$0xf]
    %v153 = vld [vmem:[%s1 + $0x150] sm:$0xf]
    %v154 = vld [vmem:[%s1 + $0x154] sm:$0xf]
    %v155 = vld [vmem:[%s1 + $0x158] sm:$0xf]
    %v156 = vld [vmem:[%s1 + $0x15c] sm:$0xf]
    %v157 = vld [vmem:[%s1 + $0x160] sm:$0xf]
    %v158 = vld [vmem:[%s1 + $0x164] sm:$0xf]
    %v159 = vld [vmem:[%s1 + $0x168] sm:$0xf]
    %v160 = vld [vmem:[%s1 + $0x16c] sm:$0xf]
    %v161 = vld [vmem:[%s1 + $0x170] sm:$0xf]
    %v162 = vld [vmem:[%s1 + $0x174] sm:$0xf]
    %v163 = vld [vmem:[%s1 + $0x178] sm:$0xf]
    %v164 = vld [vmem:[%s1 + $0x17c] sm:$0xf]
    %v165 = vld [vmem:[%s1 + $0x180] sm:$0xf]
    %v166 = vld [vmem:[%s1 + $0x184] sm:$0xf]
    %v167 = vld [vmem:[%s2] sm:$0x1]
    %v169 = vlaneseq
    %v170 = vshrl.u32 %v169, 7
    %v171 = vsub.s32 0, %v170
    %v172 = vrot.slane %v167, %v171
    %v182 = vunpack.c.l.b16 %v47
    %v183 = vunpack.c.h.b16 %v47
    %v184 = vunpack.c.l.b16 %v48
    %v185 = vunpack.c.h.b16 %v48
    %v186 = vunpack.c.l.b16 %v49
    %v187 = vunpack.c.h.b16 %v49
    %v188 = vunpack.c.l.b16 %v50
    %v189 = vunpack.c.l.b16 %v51
    %v190 = vunpack.c.h.b16 %v51
    %v191 = vunpack.c.l.b16 %v52
    %v192 = vunpack.c.h.b16 %v52
    %v193 = vunpack.c.l.b16 %v53
    %v194 = vunpack.c.h.b16 %v53
    %v195 = vunpack.c.l.b16 %v54
    %v196 = vpack.c.b16 %v189, %v182
    %v197 = vpack.c.b16 %v190, %v183
    %v198 = vpack.c.b16 %v191, %v184
    %v199 = vpack.c.b16 %v192, %v185
    %v200 = vpack.c.b16 %v193, %v186
    %v201 = vpack.c.b16 %v194, %v187
    %v202 = vpack.c.b16 %v195, %v188
    %v307 = vunpack.c.l.b16 %v69
    %v308 = vunpack.c.l.b16 %v70
    %v309 = vunpack.c.l.b16 %v71
    %v310 = vunpack.c.l.b16 %v72
    %v311 = vunpack.c.l.b16 %v73
    %v312 = vunpack.c.l.b16 %v74
    %v313 = vunpack.c.l.b16 %v75
    %v314 = vunpack.c.l.b16 %v76
    %v315 = vunpack.c.l.b16 %v77
    %v316 = vunpack.c.l.b16 %v78
    %v317 = vunpack.c.l.b16 %v79
    %v318 = vunpack.c.l.b16 %v80
    %v319 = vunpack.c.l.b16 %v81
    %v320 = vunpack.c.l.b16 %v82
    %v321 = vunpack.c.l.b16 %v83
    %v322 = vunpack.c.l.b16 %v84
    %v323 = vunpack.c.l.b16 %v85
    %v324 = vunpack.c.l.b16 %v86
    %v325 = vunpack.c.l.b16 %v87
    %v326 = vunpack.c.l.b16 %v88
    %v327 = vunpack.c.l.b16 %v89
    %v328 = vunpack.c.l.b16 %v90
    %v329 = vunpack.c.l.b16 %v91
    %v330 = vunpack.c.l.b16 %v92
    %v331 = vunpack.c.l.b16 %v93
    %v332 = vunpack.c.l.b16 %v94
    %v333 = vunpack.c.l.b16 %v95
    %v334 = vunpack.c.l.b16 %v96
    %v335 = vunpack.c.l.b16 %v97
    %v336 = vunpack.c.l.b16 %v98
    %v337 = vunpack.c.l.b16 %v99
    %v338 = vunpack.c.l.b16 %v100
    %v339 = vunpack.c.l.b16 %v101
    %v340 = vunpack.c.l.b16 %v102
    %v341 = vunpack.c.l.b16 %v103
    %v342 = vunpack.c.l.b16 %v104
    %v343 = vunpack.c.l.b16 %v105
    %v344 = vunpack.c.l.b16 %v106
    %v345 = vunpack.c.l.b16 %v107
    %v346 = vunpack.c.l.b16 %v108
    %v347 = vunpack.c.l.b16 %v109
    %v348 = vunpack.c.l.b16 %v110
    %v349 = vunpack.c.l.b16 %v111
    %v350 = vunpack.c.l.b16 %v112
    %v351 = vunpack.c.l.b16 %v113
    %v352 = vunpack.c.l.b16 %v114
    %v353 = vunpack.c.l.b16 %v115
    %v354 = vunpack.c.l.b16 %v116
    %v355 = vunpack.c.l.b16 %v117
    %v356 = vunpack.c.l.b16 %v118
    %v357 = vunpack.c.l.b16 %v119
    %v358 = vunpack.c.l.b16 %v120
    %v359 = vunpack.c.l.b16 %v121
    %v360 = vunpack.c.l.b16 %v122
    %v361 = vunpack.c.l.b16 %v123
    %v362 = vunpack.c.l.b16 %v124
    %v363 = vunpack.c.l.b16 %v125
    %v364 = vunpack.c.l.b16 %v126
    %v365 = vunpack.c.l.b16 %v127
    %v366 = vunpack.c.l.b16 %v128
    %v367 = vunpack.c.l.b16 %v129
    %v368 = vunpack.c.l.b16 %v130
    %v369 = vunpack.c.l.b16 %v131
    %v370 = vunpack.c.l.b16 %v132
    %v371 = vunpack.c.l.b16 %v133
    %v372 = vunpack.c.l.b16 %v134
    %v373 = vunpack.c.l.b16 %v135
    %v374 = vunpack.c.l.b16 %v136
    %v375 = vunpack.c.l.b16 %v137
    %v376 = vunpack.c.l.b16 %v138
    %v377 = vunpack.c.l.b16 %v139
    %v378 = vunpack.c.l.b16 %v140
    %v379 = vunpack.c.l.b16 %v141
    %v380 = vunpack.c.l.b16 %v142
    %v381 = vunpack.c.l.b16 %v143
    %v382 = vunpack.c.l.b16 %v144
    %v383 = vunpack.c.l.b16 %v145
    %v384 = vunpack.c.l.b16 %v146
    %v385 = vunpack.c.l.b16 %v147
    %v386 = vunpack.c.l.b16 %v148
    %v387 = vunpack.c.l.b16 %v149
    %v388 = vunpack.c.l.b16 %v150
    %v389 = vunpack.c.l.b16 %v151
    %v390 = vunpack.c.l.b16 %v152
    %v391 = vunpack.c.l.b16 %v153
    %v392 = vunpack.c.l.b16 %v154
    %v393 = vunpack.c.l.b16 %v155
    %v394 = vunpack.c.l.b16 %v156
    %v395 = vunpack.c.l.b16 %v157
    %v396 = vunpack.c.l.b16 %v158
    %v397 = vunpack.c.l.b16 %v159
    %v398 = vunpack.c.l.b16 %v160
    %v399 = vunpack.c.l.b16 %v161
    %v400 = vunpack.c.l.b16 %v162
    %v401 = vunpack.c.l.b16 %v163
    %v402 = vunpack.c.l.b16 %v164
    %v403 = vunpack.c.l.b16 %v165
    %v404 = vunpack.c.l.b16 %v166
    %v405 = vpack.c.b16 %v308, %v307
    %v406 = vpack.c.b16 %v310, %v309
    %v407 = vpack.c.b16 %v312, %v311
    %v408 = vpack.c.b16 %v314, %v313
    %v409 = vpack.c.b16 %v316, %v315
    %v410 = vpack.c.b16 %v318, %v317
    %v411 = vpack.c.b16 %v320, %v319
    %v412 = vpack.c.b16 %v322, %v321
    %v413 = vpack.c.b16 %v324, %v323
    %v414 = vpack.c.b16 %v326, %v325
    %v415 = vpack.c.b16 %v328, %v327
    %v416 = vpack.c.b16 %v330, %v329
    %v417 = vpack.c.b16 %v332, %v331
    %v418 = vpack.c.b16 %v334, %v333
    %v419 = vpack.c.b16 %v336, %v335
    %v420 = vpack.c.b16 %v338, %v337
    %v421 = vpack.c.b16 %v340, %v339
    %v422 = vpack.c.b16 %v342, %v341
    %v423 = vpack.c.b16 %v344, %v343
    %v424 = vpack.c.b16 %v346, %v345
    %v425 = vpack.c.b16 %v348, %v347
    %v426 = vpack.c.b16 %v350, %v349
    %v427 = vpack.c.b16 %v352, %v351
    %v428 = vpack.c.b16 %v354, %v353
    %v429 = vpack.c.b16 %v356, %v355
    %v430 = vpack.c.b16 %v358, %v357
    %v431 = vpack.c.b16 %v360, %v359
    %v432 = vpack.c.b16 %v362, %v361
    %v433 = vpack.c.b16 %v364, %v363
    %v434 = vpack.c.b16 %v366, %v365
    %v435 = vpack.c.b16 %v368, %v367
    %v436 = vpack.c.b16 %v370, %v369
    %v437 = vpack.c.b16 %v372, %v371
    %v438 = vpack.c.b16 %v374, %v373
    %v439 = vpack.c.b16 %v376, %v375
    %v440 = vpack.c.b16 %v378, %v377
    %v441 = vpack.c.b16 %v380, %v379
    %v442 = vpack.c.b16 %v382, %v381
    %v443 = vpack.c.b16 %v384, %v383
    %v444 = vpack.c.b16 %v386, %v385
    %v445 = vpack.c.b16 %v388, %v387
    %v446 = vpack.c.b16 %v390, %v389
    %v447 = vpack.c.b16 %v392, %v391
    %v448 = vpack.c.b16 %v394, %v393
    %v449 = vpack.c.b16 %v396, %v395
    %v450 = vpack.c.b16 %v398, %v397
    %v451 = vpack.c.b16 %v400, %v399
    %v452 = vpack.c.b16 %v402, %v401
    %v453 = vpack.c.b16 %v404, %v403
    %vm503 = vcmask 130048
    %v505 = vsel %vm503, %v202, 0
    %507 = vmatprep.subr.bf16.mxu0 0
    %508 = vmatpush1.bf16.msra.mxu0 %v412
    %509 = vmatprep.subr.bf16.mxu0 0
    %510 = vmatpush1.bf16.msra.mxu0 %v411
    %511 = vmatprep.subr.bf16.mxu0 0
    %512 = vmatpush1.bf16.msra.mxu0 %v410
    %513 = vmatprep.subr.bf16.mxu0 0
    %514 = vmatpush1.bf16.msra.mxu0 %v409
    %515 = vmatprep.subr.bf16.mxu0 0
    %516 = vmatpush1.bf16.msra.mxu0 %v408
    %517 = vmatprep.subr.bf16.mxu0 0
    %518 = vmatpush1.bf16.msra.mxu0 %v407
    %519 = vmatprep.subr.bf16.mxu0 0
    %520 = vmatpush1.bf16.msra.mxu0 %v406
    %521 = vmatprep.subr.bf16.mxu0 0
    %522 = vmatpush1.bf16.msra.mxu0 %v405
    %523 = vmatprep.subr.bf16.mxu0 0
    %524 = vmatpush2.bf16.msra.mxu0 %v420
    %525 = vmatprep.subr.bf16.mxu0 0
    %526 = vmatpush2.bf16.msra.mxu0 %v419
    %527 = vmatprep.subr.bf16.mxu0 0
    %528 = vmatpush2.bf16.msra.mxu0 %v418
    %529 = vmatprep.subr.bf16.mxu0 0
    %530 = vmatpush2.bf16.msra.mxu0 %v417
    %531 = vmatprep.subr.bf16.mxu0 0
    %532 = vmatpush2.bf16.msra.mxu0 %v416
    %533 = vmatprep.subr.bf16.mxu0 0
    %534 = vmatpush2.bf16.msra.mxu0 %v415
    %535 = vmatprep.subr.bf16.mxu0 0
    %536 = vmatpush2.bf16.msra.mxu0 %v414
    %537 = vmatprep.subr.bf16.mxu0 0
    %538 = vmatpush2.bf16.msra.mxu0 %v413
    %539 = vmatprep.mubr.bf16.mxu0 %v197
    %540 = vmatmul.mubr.bf16.gmra.mxu0 %v196
    %v541 = vpop.f32.mrf.mxu0
    %v542 = vadd.f32 %v172, %v541
    %v543 = vpop.f32.mrf.mxu0
    %v544 = vpop.f32.mrf.mxu0
    %v545 = vadd.f32 %v172, %v544
    %v546 = vpop.f32.mrf.mxu0
    %547 = vdwg.mxu0
    %548 = vmatprep.subr.bf16.mxu0 0
    %549 = vmatpush1.bf16.msra.mxu0 %v428
    %550 = vmatprep.subr.bf16.mxu0 0
    %551 = vmatpush1.bf16.msra.mxu0 %v427
    %552 = vmatprep.subr.bf16.mxu0 0
    %553 = vmatpush1.bf16.msra.mxu0 %v426
    %554 = vmatprep.subr.bf16.mxu0 0
    %555 = vmatpush1.bf16.msra.mxu0 %v425
    %556 = vmatprep.subr.bf16.mxu0 0
    %557 = vmatpush1.bf16.msra.mxu0 %v424
    %558 = vmatprep.subr.bf16.mxu0 0
    %559 = vmatpush1.bf16.msra.mxu0 %v423
    %560 = vmatprep.subr.bf16.mxu0 0
    %561 = vmatpush1.bf16.msra.mxu0 %v422
    %562 = vmatprep.subr.bf16.mxu0 0
    %563 = vmatpush1.bf16.msra.mxu0 %v421
    %564 = vmatprep.subr.bf16.mxu0 0
    %565 = vmatpush2.bf16.msra.mxu0 %v436
    %566 = vmatprep.subr.bf16.mxu0 0
    %567 = vmatpush2.bf16.msra.mxu0 %v435
    %568 = vmatprep.subr.bf16.mxu0 0
    %569 = vmatpush2.bf16.msra.mxu0 %v434
    %570 = vmatprep.subr.bf16.mxu0 0
    %571 = vmatpush2.bf16.msra.mxu0 %v433
    %572 = vmatprep.subr.bf16.mxu0 0
    %573 = vmatpush2.bf16.msra.mxu0 %v432
    %574 = vmatprep.subr.bf16.mxu0 0
    %575 = vmatpush2.bf16.msra.mxu0 %v431
    %576 = vmatprep.subr.bf16.mxu0 0
    %577 = vmatpush2.bf16.msra.mxu0 %v430
    %578 = vmatprep.subr.bf16.mxu0 0
    %579 = vmatpush2.bf16.msra.mxu0 %v429
    %580 = vmatprep.mubr.bf16.mxu0 %v199
    %581 = vmatmul.mubr.bf16.gmra.mxu0 %v198
    %v582 = vpop.f32.mrf.mxu0
    %v583 = vadd.f32 %v542, %v582
    %v584 = vpop.f32.mrf.mxu0
    %v585 = vpop.f32.mrf.mxu0
    %v586 = vadd.f32 %v545, %v585
    %v587 = vpop.f32.mrf.mxu0
    %588 = vdwg.mxu0
    %589 = vmatprep.subr.bf16.mxu0 0
    %590 = vmatpush1.bf16.msra.mxu0 %v444
    %591 = vmatprep.subr.bf16.mxu0 0
    %592 = vmatpush1.bf16.msra.mxu0 %v443
    %593 = vmatprep.subr.bf16.mxu0 0
    %594 = vmatpush1.bf16.msra.mxu0 %v442
    %595 = vmatprep.subr.bf16.mxu0 0
    %596 = vmatpush1.bf16.msra.mxu0 %v441
    %597 = vmatprep.subr.bf16.mxu0 0
    %598 = vmatpush1.bf16.msra.mxu0 %v440
    %599 = vmatprep.subr.bf16.mxu0 0
    %600 = vmatpush1.bf16.msra.mxu0 %v439
    %601 = vmatprep.subr.bf16.mxu0 0
    %602 = vmatpush1.bf16.msra.mxu0 %v438
    %603 = vmatprep.subr.bf16.mxu0 0
    %604 = vmatpush1.bf16.msra.mxu0 %v437
    %605 = vmatprep.subr.bf16.mxu0 0
    %606 = vmatpush2.bf16.msra.mxu0 %v452
    %607 = vmatprep.subr.bf16.mxu0 0
    %608 = vmatpush2.bf16.msra.mxu0 %v451
    %609 = vmatprep.subr.bf16.mxu0 0
    %610 = vmatpush2.bf16.msra.mxu0 %v450
    %611 = vmatprep.subr.bf16.mxu0 0
    %612 = vmatpush2.bf16.msra.mxu0 %v449
    %613 = vmatprep.subr.bf16.mxu0 0
    %614 = vmatpush2.bf16.msra.mxu0 %v448
    %615 = vmatprep.subr.bf16.mxu0 0
    %616 = vmatpush2.bf16.msra.mxu0 %v447
    %617 = vmatprep.subr.bf16.mxu0 0
    %618 = vmatpush2.bf16.msra.mxu0 %v446
    %619 = vmatprep.subr.bf16.mxu0 0
    %620 = vmatpush2.bf16.msra.mxu0 %v445
    %621 = vmatprep.mubr.bf16.mxu0 %v201
    %622 = vmatmul.mubr.bf16.gmra.mxu0 %v200
    %v623 = vpop.f32.mrf.mxu0
    %v624 = vadd.f32 %v583, %v623
    %v625 = vpop.f32.mrf.mxu0
    %v626 = vpop.f32.mrf.mxu0
    %v627 = vadd.f32 %v586, %v626
    %v628 = vpop.f32.mrf.mxu0
    %629 = vdwg.mxu0
    %630 = vmatprep.subr.bf16.mxu0 0
    %631 = vmatpush1.bf16.msra.mxu0 0
    %632 = vmatprep.subr.bf16.mxu0 0
    %633 = vmatpush1.bf16.msra.mxu0 0
    %634 = vmatprep.subr.bf16.mxu0 0
    %635 = vmatpush1.bf16.msra.mxu0 0
    %636 = vmatprep.subr.bf16.mxu0 0
    %637 = vmatpush1.bf16.msra.mxu0 0
    %638 = vmatprep.subr.bf16.mxu0 0
    %639 = vmatpush1.bf16.msra.mxu0 0
    %640 = vmatprep.subr.bf16.mxu0 0
    %641 = vmatpush1.bf16.msra.mxu0 0
    %642 = vmatprep.subr.bf16.mxu0 0
    %643 = vmatpush1.bf16.msra.mxu0 0
    %644 = vmatprep.subr.bf16.mxu0 0
    %645 = vmatpush1.bf16.msra.mxu0 %v453
    %646 = vmatprep.subr.bf16.mxu0 0
    %647 = vmatpush2.bf16.msra.mxu0 0
    %648 = vmatprep.subr.bf16.mxu0 0
    %649 = vmatpush2.bf16.msra.mxu0 0
    %650 = vmatprep.subr.bf16.mxu0 0
    %651 = vmatpush2.bf16.msra.mxu0 0
    %652 = vmatprep.subr.bf16.mxu0 0
    %653 = vmatpush2.bf16.msra.mxu0 0
    %654 = vmatprep.subr.bf16.mxu0 0
    %655 = vmatpush2.bf16.msra.mxu0 0
    %656 = vmatprep.subr.bf16.mxu0 0
    %657 = vmatpush2.bf16.msra.mxu0 0
    %658 = vmatprep.subr.bf16.mxu0 0
    %659 = vmatpush2.bf16.msra.mxu0 0
    %660 = vmatprep.subr.bf16.mxu0 0
    %661 = vmatpush2.bf16.msra.mxu0 0
    %662 = vmatprep.mubr.bf16.mxu0 0
    %663 = vmatmul.mubr.bf16.gmra.mxu0 %v505
    %v664 = vpop.f32.mrf.mxu0
    %v665 = vadd.f32 %v624, %v664
    %v666 = vpop.f32.mrf.mxu0
    %v667 = vpop.f32.mrf.mxu0
    %v668 = vadd.f32 %v627, %v667
    %v669 = vpop.f32.mrf.mxu0
    %670 = vdwg.mxu0
    %v671 = vmax.f32 %v665, 0.0
    %v672 = vmax.f32 %v668, 0.0
    %v673 = vpack.c.bf16 %v672, %v671
    %v674 = vld [vmem:[%s3] sm:$0xff]
    %v675 = vld [vmem:[%s3 + $0x8] sm:$0xff]
    %v676 = vld [vmem:[%s3 + $0x10] sm:$0xff]
    %v677 = vld [vmem:[%s3 + $0x18] sm:$0xff]
    %v678 = vld [vmem:[%s3 + $0x20] sm:$0xff]
    %v679 = vld [vmem:[%s3 + $0x28] sm:$0xff]
    %v680 = vld [vmem:[%s3 + $0x30] sm:$0xff]
    %v681 = vld [vmem:[%s3 + $0x38] sm:$0xff]
    %v682 = vld [vmem:[%s3 + $0x40] sm:$0xff]
    %v683 = vld [vmem:[%s3 + $0x48] sm:$0xff]
    %v684 = vld [vmem:[%s3 + $0x50] sm:$0xff]
    %v685 = vld [vmem:[%s3 + $0x58] sm:$0xff]
    %v686 = vld [vmem:[%s3 + $0x60] sm:$0xff]
    %v687 = vld [vmem:[%s3 + $0x68] sm:$0xff]
    %v688 = vld [vmem:[%s3 + $0x70] sm:$0xff]
    %v689 = vld [vmem:[%s3 + $0x78] sm:$0xff]
    %v690 = vld [vmem:[%s4] sm:$0x3]
    %v692 = vlaneseq
    %v693 = vshrl.u32 %v692, 7
    %v694 = vsub.s32 0, %v693
    %v695 = vrot.slane %v690, %v694
    %v696 = vlaneseq
    %v697 = vshrl.u32 %v696, 7
    %v698 = vsub.s32 1, %v697
    %v699 = vrot.slane %v690, %v698
    %v718 = vunpack.c.l.b16 %v674
    %v719 = vunpack.c.h.b16 %v674
    %v720 = vunpack.c.l.b16 %v675
    %v721 = vunpack.c.h.b16 %v675
    %v722 = vunpack.c.l.b16 %v676
    %v723 = vunpack.c.h.b16 %v676
    %v724 = vunpack.c.l.b16 %v677
    %v725 = vunpack.c.h.b16 %v677
    %v726 = vunpack.c.l.b16 %v678
    %v727 = vunpack.c.h.b16 %v678
    %v728 = vunpack.c.l.b16 %v679
    %v729 = vunpack.c.h.b16 %v679
    %v730 = vunpack.c.l.b16 %v680
    %v731 = vunpack.c.h.b16 %v680
    %v732 = vunpack.c.l.b16 %v681
    %v733 = vunpack.c.h.b16 %v681
    %v734 = vunpack.c.l.b16 %v682
    %v735 = vunpack.c.h.b16 %v682
    %v736 = vunpack.c.l.b16 %v683
    %v737 = vunpack.c.h.b16 %v683
    %v738 = vunpack.c.l.b16 %v684
    %v739 = vunpack.c.h.b16 %v684
    %v740 = vunpack.c.l.b16 %v685
    %v741 = vunpack.c.h.b16 %v685
    %v742 = vunpack.c.l.b16 %v686
    %v743 = vunpack.c.h.b16 %v686
    %v744 = vunpack.c.l.b16 %v687
    %v745 = vunpack.c.h.b16 %v687
    %v746 = vunpack.c.l.b16 %v688
    %v747 = vunpack.c.h.b16 %v688
    %v748 = vunpack.c.l.b16 %v689
    %v749 = vunpack.c.h.b16 %v689
    %v750 = vpack.c.b16 %v720, %v718
    %v751 = vpack.c.b16 %v721, %v719
    %v752 = vpack.c.b16 %v724, %v722
    %v753 = vpack.c.b16 %v725, %v723
    %v754 = vpack.c.b16 %v728, %v726
    %v755 = vpack.c.b16 %v729, %v727
    %v756 = vpack.c.b16 %v732, %v730
    %v757 = vpack.c.b16 %v733, %v731
    %v758 = vpack.c.b16 %v736, %v734
    %v759 = vpack.c.b16 %v737, %v735
    %v760 = vpack.c.b16 %v740, %v738
    %v761 = vpack.c.b16 %v741, %v739
    %v762 = vpack.c.b16 %v744, %v742
    %v763 = vpack.c.b16 %v745, %v743
    %v764 = vpack.c.b16 %v748, %v746
    %v765 = vpack.c.b16 %v749, %v747
    %782 = vmatprep.subr.bf16.mxu0 %v765
    %783 = vmatpush1.bf16.msra.mxu0 %v764
    %784 = vmatprep.subr.bf16.mxu0 %v763
    %785 = vmatpush1.bf16.msra.mxu0 %v762
    %786 = vmatprep.subr.bf16.mxu0 %v761
    %787 = vmatpush1.bf16.msra.mxu0 %v760
    %788 = vmatprep.subr.bf16.mxu0 %v759
    %789 = vmatpush1.bf16.msra.mxu0 %v758
    %790 = vmatprep.subr.bf16.mxu0 %v757
    %791 = vmatpush1.bf16.msra.mxu0 %v756
    %792 = vmatprep.subr.bf16.mxu0 %v755
    %793 = vmatpush1.bf16.msra.mxu0 %v754
    %794 = vmatprep.subr.bf16.mxu0 %v753
    %795 = vmatpush1.bf16.msra.mxu0 %v752
    %796 = vmatprep.subr.bf16.mxu0 %v751
    %797 = vmatpush1.bf16.msra.mxu0 %v750
    %798 = vmatprep.subr.bf16.mxu0 0
    %799 = vmatpush2.bf16.msra.mxu0 0
    %800 = vmatprep.subr.bf16.mxu0 0
    %801 = vmatpush2.bf16.msra.mxu0 0
    %802 = vmatprep.subr.bf16.mxu0 0
    %803 = vmatpush2.bf16.msra.mxu0 0
    %804 = vmatprep.subr.bf16.mxu0 0
    %805 = vmatpush2.bf16.msra.mxu0 0
    %806 = vmatprep.subr.bf16.mxu0 0
    %807 = vmatpush2.bf16.msra.mxu0 0
    %808 = vmatprep.subr.bf16.mxu0 0
    %809 = vmatpush2.bf16.msra.mxu0 0
    %810 = vmatprep.subr.bf16.mxu0 0
    %811 = vmatpush2.bf16.msra.mxu0 0
    %812 = vmatprep.subr.bf16.mxu0 0
    %813 = vmatpush2.bf16.msra.mxu0 0
    %814 = vmatprep.mubr.bf16.mxu0 0
    %815 = vmatmul.mubr.bf16.gmra.mxu0 %v673
    %v816 = vpop.f32.mrf.mxu0
    %v817 = vadd.f32 %v695, %v816
    %v818 = vpop.f32.mrf.mxu0
    %v819 = vadd.f32 %v699, %v818
    %v820 = vpop.f32.mrf.mxu0
    %v821 = vadd.f32 %v695, %v820
    %v822 = vpop.f32.mrf.mxu0
    %v823 = vadd.f32 %v699, %v822
    %824 = vdwg.mxu0
    %v825 = vmax.f32 %v819, 0.0
    %v826 = vmax.f32 %v823, 0.0
    %v827 = vld [vmem:[%s9] sm:$0x1]
    %v829 = vlaneseq
    %v830 = vshrl.u32 %v829, 7
    %v831 = vsub.s32 0, %v830
    %v832 = vrot.slane %v827, %v831
    %v834 = vmul.f32 %v832, %v825
    %v835 = vmul.f32 %v832, %v826
    %v836 = vadd.f32 %v834, %v817
    %v837 = vadd.f32 %v835, %v821
    %v838 = vpack.c.bf16 %v837, %v836
    %v839 = vld [vmem:[%s5] sm:$0xf]
    %v840 = vld [vmem:[%s5 + $0x4] sm:$0xf]
    %v841 = vld [vmem:[%s5 + $0x8] sm:$0xf]
    %v842 = vld [vmem:[%s5 + $0xc] sm:$0xf]
    %v843 = vld [vmem:[%s5 + $0x10] sm:$0xf]
    %v844 = vld [vmem:[%s5 + $0x14] sm:$0xf]
    %v845 = vld [vmem:[%s5 + $0x18] sm:$0xf]
    %v846 = vld [vmem:[%s5 + $0x1c] sm:$0xf]
    %v847 = vld [vmem:[%s5 + $0x20] sm:$0xf]
    %v848 = vld [vmem:[%s5 + $0x24] sm:$0xf]
    %v849 = vld [vmem:[%s5 + $0x28] sm:$0xf]
    %v850 = vld [vmem:[%s5 + $0x2c] sm:$0xf]
    %v851 = vld [vmem:[%s5 + $0x30] sm:$0xf]
    %v852 = vld [vmem:[%s5 + $0x34] sm:$0xf]
    %v853 = vld [vmem:[%s5 + $0x38] sm:$0xf]
    %v854 = vld [vmem:[%s5 + $0x3c] sm:$0xf]
    %v855 = vld [vmem:[%s6] sm:$0x1]
    %v857 = vlaneseq
    %v858 = vshrl.u32 %v857, 7
    %v859 = vsub.s32 0, %v858
    %v860 = vrot.slane %v855, %v859
    %v878 = vunpack.c.l.b16 %v839
    %v879 = vunpack.c.l.b16 %v840
    %v880 = vunpack.c.l.b16 %v841
    %v881 = vunpack.c.l.b16 %v842
    %v882 = vunpack.c.l.b16 %v843
    %v883 = vunpack.c.l.b16 %v844
    %v884 = vunpack.c.l.b16 %v845
    %v885 = vunpack.c.l.b16 %v846
    %v886 = vunpack.c.l.b16 %v847
    %v887 = vunpack.c.l.b16 %v848
    %v888 = vunpack.c.l.b16 %v849
    %v889 = vunpack.c.l.b16 %v850
    %v890 = vunpack.c.l.b16 %v851
    %v891 = vunpack.c.l.b16 %v852
    %v892 = vunpack.c.l.b16 %v853
    %v893 = vunpack.c.l.b16 %v854
    %v894 = vpack.c.b16 %v879, %v878
    %v895 = vpack.c.b16 %v881, %v880
    %v896 = vpack.c.b16 %v883, %v882
    %v897 = vpack.c.b16 %v885, %v884
    %v898 = vpack.c.b16 %v887, %v886
    %v899 = vpack.c.b16 %v889, %v888
    %v900 = vpack.c.b16 %v891, %v890
    %v901 = vpack.c.b16 %v893, %v892
    %910 = vmatprep.subr.bf16.mxu0 0
    %911 = vmatpush1.bf16.msra.mxu0 %v901
    %912 = vmatprep.subr.bf16.mxu0 0
    %913 = vmatpush1.bf16.msra.mxu0 %v900
    %914 = vmatprep.subr.bf16.mxu0 0
    %915 = vmatpush1.bf16.msra.mxu0 %v899
    %916 = vmatprep.subr.bf16.mxu0 0
    %917 = vmatpush1.bf16.msra.mxu0 %v898
    %918 = vmatprep.subr.bf16.mxu0 0
    %919 = vmatpush1.bf16.msra.mxu0 %v897
    %920 = vmatprep.subr.bf16.mxu0 0
    %921 = vmatpush1.bf16.msra.mxu0 %v896
    %922 = vmatprep.subr.bf16.mxu0 0
    %923 = vmatpush1.bf16.msra.mxu0 %v895
    %924 = vmatprep.subr.bf16.mxu0 0
    %925 = vmatpush1.bf16.msra.mxu0 %v894
    %926 = vmatprep.subr.bf16.mxu0 0
    %927 = vmatpush2.bf16.msra.mxu0 0
    %928 = vmatprep.subr.bf16.mxu0 0
    %929 = vmatpush2.bf16.msra.mxu0 0
    %930 = vmatprep.subr.bf16.mxu0 0
    %931 = vmatpush2.bf16.msra.mxu0 0
    %932 = vmatprep.subr.bf16.mxu0 0
    %933 = vmatpush2.bf16.msra.mxu0 0
    %934 = vmatprep.subr.bf16.mxu0 0
    %935 = vmatpush2.bf16.msra.mxu0 0
    %936 = vmatprep.subr.bf16.mxu0 0
    %937 = vmatpush2.bf16.msra.mxu0 0
    %938 = vmatprep.subr.bf16.mxu0 0
    %939 = vmatpush2.bf16.msra.mxu0 0
    %940 = vmatprep.subr.bf16.mxu0 0
    %941 = vmatpush2.bf16.msra.mxu0 0
    %942 = vmatprep.mubr.bf16.mxu0 0
    %943 = vmatmul.mubr.bf16.gmra.mxu0 %v838
    %v944 = vpop.f32.mrf.mxu0
    %v945 = vadd.f32 %v860, %v944
    %v946 = vpop.f32.mrf.mxu0
    %v947 = vpop.f32.mrf.mxu0
    %v948 = vadd.f32 %v860, %v947
    %v949 = vpop.f32.mrf.mxu0
    %950 = vdwg.mxu0
    %v951 = vmax.f32 %v945, 0.0
    %v952 = vmax.f32 %v948, 0.0
    %v953 = vpack.c.bf16 %v952, %v951
    %v954 = vld [vmem:[%s7] sm:$0xff]
    %v955 = vld [vmem:[%s7 + $0x8] sm:$0xff]
    %v956 = vld [vmem:[%s7 + $0x10] sm:$0xff]
    %v957 = vld [vmem:[%s7 + $0x18] sm:$0xf]
    %v958 = vld [vmem:[%s7 + $0x1c] sm:$0xff]
    %v959 = vld [vmem:[%s7 + $0x24] sm:$0xff]
    %v960 = vld [vmem:[%s7 + $0x2c] sm:$0xff]
    %v961 = vld [vmem:[%s7 + $0x34] sm:$0xf]
    %v962 = vld [vmem:[%s7 + $0x38] sm:$0xff]
    %v963 = vld [vmem:[%s7 + $0x40] sm:$0xff]
    %v964 = vld [vmem:[%s7 + $0x48] sm:$0xff]
    %v965 = vld [vmem:[%s7 + $0x50] sm:$0xf]
    %v966 = vld [vmem:[%s7 + $0x54] sm:$0xff]
    %v967 = vld [vmem:[%s7 + $0x5c] sm:$0xff]
    %v968 = vld [vmem:[%s7 + $0x64] sm:$0xff]
    %v969 = vld [vmem:[%s7 + $0x6c] sm:$0xf]
    %v970 = vld [vmem:[%s7 + $0x70] sm:$0xff]
    %v971 = vld [vmem:[%s7 + $0x78] sm:$0xff]
    %v972 = vld [vmem:[%s7 + $0x80] sm:$0xff]
    %v973 = vld [vmem:[%s7 + $0x88] sm:$0xf]
    %v974 = vld [vmem:[%s7 + $0x8c] sm:$0xff]
    %v975 = vld [vmem:[%s7 + $0x94] sm:$0xff]
    %v976 = vld [vmem:[%s7 + $0x9c] sm:$0xff]
    %v977 = vld [vmem:[%s7 + $0xa4] sm:$0xf]
    %v978 = vld [vmem:[%s7 + $0xa8] sm:$0xff]
    %v979 = vld [vmem:[%s7 + $0xb0] sm:$0xff]
    %v980 = vld [vmem:[%s7 + $0xb8] sm:$0xff]
    %v981 = vld [vmem:[%s7 + $0xc0] sm:$0xf]
    %v982 = vld [vmem:[%s7 + $0xc4] sm:$0xff]
    %v983 = vld [vmem:[%s7 + $0xcc] sm:$0xff]
    %v984 = vld [vmem:[%s7 + $0xd4] sm:$0xff]
    %v985 = vld [vmem:[%s7 + $0xdc] sm:$0xf]
    %v986 = vld [vmem:[%s7 + $0xe0] sm:$0xff]
    %v987 = vld [vmem:[%s7 + $0xe8] sm:$0xff]
    %v988 = vld [vmem:[%s7 + $0xf0] sm:$0xff]
    %v989 = vld [vmem:[%s7 + $0xf8] sm:$0xf]
    %v990 = vld [vmem:[%s7 + $0xfc] sm:$0xff]
    %v991 = vld [vmem:[%s7 + $0x104] sm:$0xff]
    %v992 = vld [vmem:[%s7 + $0x10c] sm:$0xff]
    %v993 = vld [vmem:[%s7 + $0x114] sm:$0xf]
    %v994 = vld [vmem:[%s7 + $0x118] sm:$0xff]
    %v995 = vld [vmem:[%s7 + $0x120] sm:$0xff]
    %v996 = vld [vmem:[%s7 + $0x128] sm:$0xff]
    %v997 = vld [vmem:[%s7 + $0x130] sm:$0xf]
    %v998 = vld [vmem:[%s7 + $0x134] sm:$0xff]
    %v999 = vld [vmem:[%s7 + $0x13c] sm:$0xff]
    %v1000 = vld [vmem:[%s7 + $0x144] sm:$0xff]
    %v1001 = vld [vmem:[%s7 + $0x14c] sm:$0xf]
    %v1002 = vld [vmem:[%s7 + $0x150] sm:$0xff]
    %v1003 = vld [vmem:[%s7 + $0x158] sm:$0xff]
    %v1004 = vld [vmem:[%s7 + $0x160] sm:$0xff]
    %v1005 = vld [vmem:[%s7 + $0x168] sm:$0xf]
    %v1006 = vld [vmem:[%s7 + $0x16c] sm:$0xff]
    %v1007 = vld [vmem:[%s7 + $0x174] sm:$0xff]
    %v1008 = vld [vmem:[%s7 + $0x17c] sm:$0xff]
    %v1009 = vld [vmem:[%s7 + $0x184] sm:$0xf]
    %v1010 = vld [vmem:[%s7 + $0x188] sm:$0xff]
    %v1011 = vld [vmem:[%s7 + $0x190] sm:$0xff]
    %v1012 = vld [vmem:[%s7 + $0x198] sm:$0xff]
    %v1013 = vld [vmem:[%s7 + $0x1a0] sm:$0xf]
    %v1014 = vld [vmem:[%s7 + $0x1a4] sm:$0xff]
    %v1015 = vld [vmem:[%s7 + $0x1ac] sm:$0xff]
    %v1016 = vld [vmem:[%s7 + $0x1b4] sm:$0xff]
    %v1017 = vld [vmem:[%s7 + $0x1bc] sm:$0xf]
    %v1018 = vld [vmem:[%s8] sm:$0x7f]
    %v1020 = vlaneseq
    %v1021 = vshrl.u32 %v1020, 7
    %v1022 = vsub.s32 0, %v1021
    %v1023 = vrot.slane %v1018, %v1022
    %v1024 = vlaneseq
    %v1025 = vshrl.u32 %v1024, 7
    %v1026 = vsub.s32 1, %v1025
    %v1027 = vrot.slane %v1018, %v1026
    %v1028 = vlaneseq
    %v1029 = vshrl.u32 %v1028, 7
    %v1030 = vsub.s32 2, %v1029
    %v1031 = vrot.slane %v1018, %v1030
    %v1032 = vlaneseq
    %v1033 = vshrl.u32 %v1032, 7
    %v1034 = vsub.s32 3, %v1033
    %v1035 = vrot.slane %v1018, %v1034
    %v1036 = vlaneseq
    %v1037 = vshrl.u32 %v1036, 7
    %v1038 = vsub.s32 4, %v1037
    %v1039 = vrot.slane %v1018, %v1038
    %v1040 = vlaneseq
    %v1041 = vshrl.u32 %v1040, 7
    %v1042 = vsub.s32 5, %v1041
    %v1043 = vrot.slane %v1018, %v1042
    %v1044 = vlaneseq
    %v1045 = vshrl.u32 %v1044, 7
    %v1046 = vsub.s32 6, %v1045
    %v1047 = vrot.slane %v1018, %v1046
    %v1119 = vunpack.c.l.b16 %v954
    %v1120 = vunpack.c.h.b16 %v954
    %v1121 = vunpack.c.l.b16 %v955
    %v1122 = vunpack.c.h.b16 %v955
    %v1123 = vunpack.c.l.b16 %v956
    %v1124 = vunpack.c.h.b16 %v956
    %v1125 = vunpack.c.l.b16 %v957
    %v1126 = vunpack.c.l.b16 %v958
    %v1127 = vunpack.c.h.b16 %v958
    %v1128 = vunpack.c.l.b16 %v959
    %v1129 = vunpack.c.h.b16 %v959
    %v1130 = vunpack.c.l.b16 %v960
    %v1131 = vunpack.c.h.b16 %v960
    %v1132 = vunpack.c.l.b16 %v961
    %v1133 = vunpack.c.l.b16 %v962
    %v1134 = vunpack.c.h.b16 %v962
    %v1135 = vunpack.c.l.b16 %v963
    %v1136 = vunpack.c.h.b16 %v963
    %v1137 = vunpack.c.l.b16 %v964
    %v1138 = vunpack.c.h.b16 %v964
    %v1139 = vunpack.c.l.b16 %v965
    %v1140 = vunpack.c.l.b16 %v966
    %v1141 = vunpack.c.h.b16 %v966
    %v1142 = vunpack.c.l.b16 %v967
    %v1143 = vunpack.c.h.b16 %v967
    %v1144 = vunpack.c.l.b16 %v968
    %v1145 = vunpack.c.h.b16 %v968
    %v1146 = vunpack.c.l.b16 %v969
    %v1147 = vunpack.c.l.b16 %v970
    %v1148 = vunpack.c.h.b16 %v970
    %v1149 = vunpack.c.l.b16 %v971
    %v1150 = vunpack.c.h.b16 %v971
    %v1151 = vunpack.c.l.b16 %v972
    %v1152 = vunpack.c.h.b16 %v972
    %v1153 = vunpack.c.l.b16 %v973
    %v1154 = vunpack.c.l.b16 %v974
    %v1155 = vunpack.c.h.b16 %v974
    %v1156 = vunpack.c.l.b16 %v975
    %v1157 = vunpack.c.h.b16 %v975
    %v1158 = vunpack.c.l.b16 %v976
    %v1159 = vunpack.c.h.b16 %v976
    %v1160 = vunpack.c.l.b16 %v977
    %v1161 = vunpack.c.l.b16 %v978
    %v1162 = vunpack.c.h.b16 %v978
    %v1163 = vunpack.c.l.b16 %v979
    %v1164 = vunpack.c.h.b16 %v979
    %v1165 = vunpack.c.l.b16 %v980
    %v1166 = vunpack.c.h.b16 %v980
    %v1167 = vunpack.c.l.b16 %v981
    %v1168 = vunpack.c.l.b16 %v982
    %v1169 = vunpack.c.h.b16 %v982
    %v1170 = vunpack.c.l.b16 %v983
    %v1171 = vunpack.c.h.b16 %v983
    %v1172 = vunpack.c.l.b16 %v984
    %v1173 = vunpack.c.h.b16 %v984
    %v1174 = vunpack.c.l.b16 %v985
    %v1175 = vunpack.c.l.b16 %v986
    %v1176 = vunpack.c.h.b16 %v986
    %v1177 = vunpack.c.l.b16 %v987
    %v1178 = vunpack.c.h.b16 %v987
    %v1179 = vunpack.c.l.b16 %v988
    %v1180 = vunpack.c.h.b16 %v988
    %v1181 = vunpack.c.l.b16 %v989
    %v1182 = vunpack.c.l.b16 %v990
    %v1183 = vunpack.c.h.b16 %v990
    %v1184 = vunpack.c.l.b16 %v991
    %v1185 = vunpack.c.h.b16 %v991
    %v1186 = vunpack.c.l.b16 %v992
    %v1187 = vunpack.c.h.b16 %v992
    %v1188 = vunpack.c.l.b16 %v993
    %v1189 = vunpack.c.l.b16 %v994
    %v1190 = vunpack.c.h.b16 %v994
    %v1191 = vunpack.c.l.b16 %v995
    %v1192 = vunpack.c.h.b16 %v995
    %v1193 = vunpack.c.l.b16 %v996
    %v1194 = vunpack.c.h.b16 %v996
    %v1195 = vunpack.c.l.b16 %v997
    %v1196 = vunpack.c.l.b16 %v998
    %v1197 = vunpack.c.h.b16 %v998
    %v1198 = vunpack.c.l.b16 %v999
    %v1199 = vunpack.c.h.b16 %v999
    %v1200 = vunpack.c.l.b16 %v1000
    %v1201 = vunpack.c.h.b16 %v1000
    %v1202 = vunpack.c.l.b16 %v1001
    %v1203 = vunpack.c.l.b16 %v1002
    %v1204 = vunpack.c.h.b16 %v1002
    %v1205 = vunpack.c.l.b16 %v1003
    %v1206 = vunpack.c.h.b16 %v1003
    %v1207 = vunpack.c.l.b16 %v1004
    %v1208 = vunpack.c.h.b16 %v1004
    %v1209 = vunpack.c.l.b16 %v1005
    %v1210 = vunpack.c.l.b16 %v1006
    %v1211 = vunpack.c.h.b16 %v1006
    %v1212 = vunpack.c.l.b16 %v1007
    %v1213 = vunpack.c.h.b16 %v1007
    %v1214 = vunpack.c.l.b16 %v1008
    %v1215 = vunpack.c.h.b16 %v1008
    %v1216 = vunpack.c.l.b16 %v1009
    %v1217 = vunpack.c.l.b16 %v1010
    %v1218 = vunpack.c.h.b16 %v1010
    %v1219 = vunpack.c.l.b16 %v1011
    %v1220 = vunpack.c.h.b16 %v1011
    %v1221 = vunpack.c.l.b16 %v1012
    %v1222 = vunpack.c.h.b16 %v1012
    %v1223 = vunpack.c.l.b16 %v1013
    %v1224 = vunpack.c.l.b16 %v1014
    %v1225 = vunpack.c.h.b16 %v1014
    %v1226 = vunpack.c.l.b16 %v1015
    %v1227 = vunpack.c.h.b16 %v1015
    %v1228 = vunpack.c.l.b16 %v1016
    %v1229 = vunpack.c.h.b16 %v1016
    %v1230 = vunpack.c.l.b16 %v1017
    %v1231 = vpack.c.b16 %v1126, %v1119
    %v1232 = vpack.c.b16 %v1127, %v1120
    %v1233 = vpack.c.b16 %v1128, %v1121
    %v1234 = vpack.c.b16 %v1129, %v1122
    %v1235 = vpack.c.b16 %v1130, %v1123
    %v1236 = vpack.c.b16 %v1131, %v1124
    %v1237 = vpack.c.b16 %v1132, %v1125
    %v1238 = vpack.c.b16 %v1140, %v1133
    %v1239 = vpack.c.b16 %v1141, %v1134
    %v1240 = vpack.c.b16 %v1142, %v1135
    %v1241 = vpack.c.b16 %v1143, %v1136
    %v1242 = vpack.c.b16 %v1144, %v1137
    %v1243 = vpack.c.b16 %v1145, %v1138
    %v1244 = vpack.c.b16 %v1146, %v1139
    %v1245 = vpack.c.b16 %v1154, %v1147
    %v1246 = vpack.c.b16 %v1155, %v1148
    %v1247 = vpack.c.b16 %v1156, %v1149
    %v1248 = vpack.c.b16 %v1157, %v1150
    %v1249 = vpack.c.b16 %v1158, %v1151
    %v1250 = vpack.c.b16 %v1159, %v1152
    %v1251 = vpack.c.b16 %v1160, %v1153
    %v1252 = vpack.c.b16 %v1168, %v1161
    %v1253 = vpack.c.b16 %v1169, %v1162
    %v1254 = vpack.c.b16 %v1170, %v1163
    %v1255 = vpack.c.b16 %v1171, %v1164
    %v1256 = vpack.c.b16 %v1172, %v1165
    %v1257 = vpack.c.b16 %v1173, %v1166
    %v1258 = vpack.c.b16 %v1174, %v1167
    %v1259 = vpack.c.b16 %v1182, %v1175
    %v1260 = vpack.c.b16 %v1183, %v1176
    %v1261 = vpack.c.b16 %v1184, %v1177
    %v1262 = vpack.c.b16 %v1185, %v1178
    %v1263 = vpack.c.b16 %v1186, %v1179
    %v1264 = vpack.c.b16 %v1187, %v1180
    %v1265 = vpack.c.b16 %v1188, %v1181
    %v1266 = vpack.c.b16 %v1196, %v1189
    %v1267 = vpack.c.b16 %v1197, %v1190
    %v1268 = vpack.c.b16 %v1198, %v1191
    %v1269 = vpack.c.b16 %v1199, %v1192
    %v1270 = vpack.c.b16 %v1200, %v1193
    %v1271 = vpack.c.b16 %v1201, %v1194
    %v1272 = vpack.c.b16 %v1202, %v1195
    %v1273 = vpack.c.b16 %v1210, %v1203
    %v1274 = vpack.c.b16 %v1211, %v1204
    %v1275 = vpack.c.b16 %v1212, %v1205
    %v1276 = vpack.c.b16 %v1213, %v1206
    %v1277 = vpack.c.b16 %v1214, %v1207
    %v1278 = vpack.c.b16 %v1215, %v1208
    %v1279 = vpack.c.b16 %v1216, %v1209
    %v1280 = vpack.c.b16 %v1224, %v1217
    %v1281 = vpack.c.b16 %v1225, %v1218
    %v1282 = vpack.c.b16 %v1226, %v1219
    %v1283 = vpack.c.b16 %v1227, %v1220
    %v1284 = vpack.c.b16 %v1228, %v1221
    %v1285 = vpack.c.b16 %v1229, %v1222
    %v1286 = vpack.c.b16 %v1230, %v1223
    %1343 = vmatprep.subr.bf16.mxu0 %v1281
    %1344 = vmatpush1.bf16.msra.mxu0 %v1280
    %1345 = vmatprep.subr.bf16.mxu0 %v1274
    %1346 = vmatpush1.bf16.msra.mxu0 %v1273
    %1347 = vmatprep.subr.bf16.mxu0 %v1267
    %1348 = vmatpush1.bf16.msra.mxu0 %v1266
    %1349 = vmatprep.subr.bf16.mxu0 %v1260
    %1350 = vmatpush1.bf16.msra.mxu0 %v1259
    %1351 = vmatprep.subr.bf16.mxu0 %v1253
    %1352 = vmatpush1.bf16.msra.mxu0 %v1252
    %1353 = vmatprep.subr.bf16.mxu0 %v1246
    %1354 = vmatpush1.bf16.msra.mxu0 %v1245
    %1355 = vmatprep.subr.bf16.mxu0 %v1239
    %1356 = vmatpush1.bf16.msra.mxu0 %v1238
    %1357 = vmatprep.subr.bf16.mxu0 %v1232
    %1358 = vmatpush1.bf16.msra.mxu0 %v1231
    %1359 = vmatprep.subr.bf16.mxu0 0
    %1360 = vmatpush2.bf16.msra.mxu0 0
    %1361 = vmatprep.subr.bf16.mxu0 0
    %1362 = vmatpush2.bf16.msra.mxu0 0
    %1363 = vmatprep.subr.bf16.mxu0 0
    %1364 = vmatpush2.bf16.msra.mxu0 0
    %1365 = vmatprep.subr.bf16.mxu0 0
    %1366 = vmatpush2.bf16.msra.mxu0 0
    %1367 = vmatprep.subr.bf16.mxu0 0
    %1368 = vmatpush2.bf16.msra.mxu0 0
    %1369 = vmatprep.subr.bf16.mxu0 0
    %1370 = vmatpush2.bf16.msra.mxu0 0
    %1371 = vmatprep.subr.bf16.mxu0 0
    %1372 = vmatpush2.bf16.msra.mxu0 0
    %1373 = vmatprep.subr.bf16.mxu0 0
    %1374 = vmatpush2.bf16.msra.mxu0 0
    %1375 = vmatprep.mubr.bf16.mxu0 0
    %1376 = vmatmul.mubr.bf16.gmra.mxu0 %v953
    %v1377 = vpop.f32.mrf.mxu0
    %v1378 = vadd.f32 %v1023, %v1377
    %v1379 = vpop.f32.mrf.mxu0
    %v1380 = vadd.f32 %v1027, %v1379
    %v1381 = vpop.f32.mrf.mxu0
    %v1382 = vadd.f32 %v1023, %v1381
    %v1383 = vpop.f32.mrf.mxu0
    %v1384 = vadd.f32 %v1027, %v1383
    %1385 = vdwg.mxu0
    %1386 = vmatprep.subr.bf16.mxu0 %v1283
    %1387 = vmatpush1.bf16.msra.mxu0 %v1282
    %1388 = vmatprep.subr.bf16.mxu0 %v1276
    %1389 = vmatpush1.bf16.msra.mxu0 %v1275
    %1390 = vmatprep.subr.bf16.mxu0 %v1269
    %1391 = vmatpush1.bf16.msra.mxu0 %v1268
    %1392 = vmatprep.subr.bf16.mxu0 %v1262
    %1393 = vmatpush1.bf16.msra.mxu0 %v1261
    %1394 = vmatprep.subr.bf16.mxu0 %v1255
    %1395 = vmatpush1.bf16.msra.mxu0 %v1254
    %1396 = vmatprep.subr.bf16.mxu0 %v1248
    %1397 = vmatpush1.bf16.msra.mxu0 %v1247
    %1398 = vmatprep.subr.bf16.mxu0 %v1241
    %1399 = vmatpush1.bf16.msra.mxu0 %v1240
    %1400 = vmatprep.subr.bf16.mxu0 %v1234
    %1401 = vmatpush1.bf16.msra.mxu0 %v1233
    %1402 = vmatprep.subr.bf16.mxu0 0
    %1403 = vmatpush2.bf16.msra.mxu0 0
    %1404 = vmatprep.subr.bf16.mxu0 0
    %1405 = vmatpush2.bf16.msra.mxu0 0
    %1406 = vmatprep.subr.bf16.mxu0 0
    %1407 = vmatpush2.bf16.msra.mxu0 0
    %1408 = vmatprep.subr.bf16.mxu0 0
    %1409 = vmatpush2.bf16.msra.mxu0 0
    %1410 = vmatprep.subr.bf16.mxu0 0
    %1411 = vmatpush2.bf16.msra.mxu0 0
    %1412 = vmatprep.subr.bf16.mxu0 0
    %1413 = vmatpush2.bf16.msra.mxu0 0
    %1414 = vmatprep.subr.bf16.mxu0 0
    %1415 = vmatpush2.bf16.msra.mxu0 0
    %1416 = vmatprep.subr.bf16.mxu0 0
    %1417 = vmatpush2.bf16.msra.mxu0 0
    %1418 = vmatprep.mubr.bf16.mxu0 0
    %1419 = vmatmul.mubr.bf16.gmra.mxu0 %v953
    %v1420 = vpop.f32.mrf.mxu0
    %v1421 = vadd.f32 %v1031, %v1420
    %v1422 = vpop.f32.mrf.mxu0
    %v1423 = vadd.f32 %v1035, %v1422
    %v1424 = vpop.f32.mrf.mxu0
    %v1425 = vadd.f32 %v1031, %v1424
    %v1426 = vpop.f32.mrf.mxu0
    %v1427 = vadd.f32 %v1035, %v1426
    %1428 = vdwg.mxu0
    %1429 = vmatprep.subr.bf16.mxu0 %v1285
    %1430 = vmatpush1.bf16.msra.mxu0 %v1284
    %1431 = vmatprep.subr.bf16.mxu0 %v1278
    %1432 = vmatpush1.bf16.msra.mxu0 %v1277
    %1433 = vmatprep.subr.bf16.mxu0 %v1271
    %1434 = vmatpush1.bf16.msra.mxu0 %v1270
    %1435 = vmatprep.subr.bf16.mxu0 %v1264
    %1436 = vmatpush1.bf16.msra.mxu0 %v1263
    %1437 = vmatprep.subr.bf16.mxu0 %v1257
    %1438 = vmatpush1.bf16.msra.mxu0 %v1256
    %1439 = vmatprep.subr.bf16.mxu0 %v1250
    %1440 = vmatpush1.bf16.msra.mxu0 %v1249
    %1441 = vmatprep.subr.bf16.mxu0 %v1243
    %1442 = vmatpush1.bf16.msra.mxu0 %v1242
    %1443 = vmatprep.subr.bf16.mxu0 %v1236
    %1444 = vmatpush1.bf16.msra.mxu0 %v1235
    %1445 = vmatprep.subr.bf16.mxu0 0
    %1446 = vmatpush2.bf16.msra.mxu0 0
    %1447 = vmatprep.subr.bf16.mxu0 0
    %1448 = vmatpush2.bf16.msra.mxu0 0
    %1449 = vmatprep.subr.bf16.mxu0 0
    %1450 = vmatpush2.bf16.msra.mxu0 0
    %1451 = vmatprep.subr.bf16.mxu0 0
    %1452 = vmatpush2.bf16.msra.mxu0 0
    %1453 = vmatprep.subr.bf16.mxu0 0
    %1454 = vmatpush2.bf16.msra.mxu0 0
    %1455 = vmatprep.subr.bf16.mxu0 0
    %1456 = vmatpush2.bf16.msra.mxu0 0
    %1457 = vmatprep.subr.bf16.mxu0 0
    %1458 = vmatpush2.bf16.msra.mxu0 0
    %1459 = vmatprep.subr.bf16.mxu0 0
    %1460 = vmatpush2.bf16.msra.mxu0 0
    %1461 = vmatprep.mubr.bf16.mxu0 0
    %1462 = vmatmul.mubr.bf16.gmra.mxu0 %v953
    %v1463 = vpop.f32.mrf.mxu0
    %v1464 = vadd.f32 %v1039, %v1463
    %v1465 = vpop.f32.mrf.mxu0
    %v1466 = vadd.f32 %v1043, %v1465
    %v1467 = vpop.f32.mrf.mxu0
    %v1468 = vadd.f32 %v1039, %v1467
    %v1469 = vpop.f32.mrf.mxu0
    %v1470 = vadd.f32 %v1043, %v1469
    %1471 = vdwg.mxu0
    %1472 = vmatprep.subr.bf16.mxu0 0
    %1473 = vmatpush1.bf16.msra.mxu0 %v1286
    %1474 = vmatprep.subr.bf16.mxu0 0
    %1475 = vmatpush1.bf16.msra.mxu0 %v1279
    %1476 = vmatprep.subr.bf16.mxu0 0
    %1477 = vmatpush1.bf16.msra.mxu0 %v1272
    %1478 = vmatprep.subr.bf16.mxu0 0
    %1479 = vmatpush1.bf16.msra.mxu0 %v1265
    %1480 = vmatprep.subr.bf16.mxu0 0
    %1481 = vmatpush1.bf16.msra.mxu0 %v1258
    %1482 = vmatprep.subr.bf16.mxu0 0
    %1483 = vmatpush1.bf16.msra.mxu0 %v1251
    %1484 = vmatprep.subr.bf16.mxu0 0
    %1485 = vmatpush1.bf16.msra.mxu0 %v1244
    %1486 = vmatprep.subr.bf16.mxu0 0
    %1487 = vmatpush1.bf16.msra.mxu0 %v1237
    %1488 = vmatprep.subr.bf16.mxu0 0
    %1489 = vmatpush2.bf16.msra.mxu0 0
    %1490 = vmatprep.subr.bf16.mxu0 0
    %1491 = vmatpush2.bf16.msra.mxu0 0
    %1492 = vmatprep.subr.bf16.mxu0 0
    %1493 = vmatpush2.bf16.msra.mxu0 0
    %1494 = vmatprep.subr.bf16.mxu0 0
    %1495 = vmatpush2.bf16.msra.mxu0 0
    %1496 = vmatprep.subr.bf16.mxu0 0
    %1497 = vmatpush2.bf16.msra.mxu0 0
    %1498 = vmatprep.subr.bf16.mxu0 0
    %1499 = vmatpush2.bf16.msra.mxu0 0
    %1500 = vmatprep.subr.bf16.mxu0 0
    %1501 = vmatpush2.bf16.msra.mxu0 0
    %1502 = vmatprep.subr.bf16.mxu0 0
    %1503 = vmatpush2.bf16.msra.mxu0 0
    %1504 = vmatprep.mubr.bf16.mxu0 0
    %1505 = vmatmul.mubr.bf16.gmra.mxu0 %v953
    %v1506 = vpop.f32.mrf.mxu0
    %v1507 = vadd.f32 %v1047, %v1506
    %v1508 = vpop.f32.mrf.mxu0
    %v1509 = vpop.f32.mrf.mxu0
    %v1510 = vadd.f32 %v1047, %v1509
    %v1511 = vpop.f32.mrf.mxu0
    %1512 = vdwg.mxu0
    %v1513 = vmin.f32 %v1378, 0.0
    %v1514 = vmin.f32 %v1380, 0.0
    %v1515 = vmin.f32 %v1421, 0.0
    %v1516 = vmin.f32 %v1423, 0.0
    %v1517 = vmin.f32 %v1464, 0.0
    %v1518 = vmin.f32 %v1466, 0.0
    %v1519 = vmin.f32 %v1507, 0.0
    %v1520 = vmin.f32 %v1382, 0.0
    %v1521 = vmin.f32 %v1384, 0.0
    %v1522 = vmin.f32 %v1425, 0.0
    %v1523 = vmin.f32 %v1427, 0.0
    %v1524 = vmin.f32 %v1468, 0.0
    %v1525 = vmin.f32 %v1470, 0.0
    %v1526 = vmin.f32 %v1510, 0.0
    %v1527 = vand.u32 2147483647, %v1378
    %v1528 = vand.u32 2147483647, %v1380
    %v1529 = vand.u32 2147483647, %v1421
    %v1530 = vand.u32 2147483647, %v1423
    %v1531 = vand.u32 2147483647, %v1464
    %v1532 = vand.u32 2147483647, %v1466
    %v1533 = vand.u32 2147483647, %v1507
    %v1534 = vand.u32 2147483647, %v1382
    %v1535 = vand.u32 2147483647, %v1384
    %v1536 = vand.u32 2147483647, %v1425
    %v1537 = vand.u32 2147483647, %v1427
    %v1538 = vand.u32 2147483647, %v1468
    %v1539 = vand.u32 2147483647, %v1470
    %v1540 = vand.u32 2147483647, %v1510
    %v1541 = vsub.f32 0.0, %v1527
    %v1542 = vsub.f32 0.0, %v1528
    %v1543 = vsub.f32 0.0, %v1529
    %v1544 = vsub.f32 0.0, %v1530
    %v1545 = vsub.f32 0.0, %v1531
    %v1546 = vsub.f32 0.0, %v1532
    %v1547 = vsub.f32 0.0, %v1533
    %v1548 = vsub.f32 0.0, %v1534
    %v1549 = vsub.f32 0.0, %v1535
    %v1550 = vsub.f32 0.0, %v1536
    %v1551 = vsub.f32 0.0, %v1537
    %v1552 = vsub.f32 0.0, %v1538
    %v1553 = vsub.f32 0.0, %v1539
    %v1554 = vsub.f32 0.0, %v1540
    %v1555 = vmul.f32 %v1541, 1.442695
    %v1556 = vpow.pop %v1555
    %v1557 = vmul.f32 %v1542, 1.442695
    %v1558 = vpow.pop %v1557
    %v1559 = vmul.f32 %v1543, 1.442695
    %v1560 = vpow.pop %v1559
    %v1561 = vmul.f32 %v1544, 1.442695
    %v1562 = vpow.pop %v1561
    %v1563 = vmul.f32 %v1545, 1.442695
    %v1564 = vpow.pop %v1563
    %v1565 = vmul.f32 %v1546, 1.442695
    %v1566 = vpow.pop %v1565
    %v1567 = vmul.f32 %v1547, 1.442695
    %v1568 = vpow.pop %v1567
    %v1569 = vmul.f32 %v1548, 1.442695
    %v1570 = vpow.pop %v1569
    %v1571 = vmul.f32 %v1549, 1.442695
    %v1572 = vpow.pop %v1571
    %v1573 = vmul.f32 %v1550, 1.442695
    %v1574 = vpow.pop %v1573
    %v1575 = vmul.f32 %v1551, 1.442695
    %v1576 = vpow.pop %v1575
    %v1577 = vmul.f32 %v1552, 1.442695
    %v1578 = vpow.pop %v1577
    %v1579 = vmul.f32 %v1553, 1.442695
    %v1580 = vpow.pop %v1579
    %v1581 = vmul.f32 %v1554, 1.442695
    %v1582 = vpow.pop %v1581
    %v1583 = vadd.f32 %v1556, 1.0
    %v1584 = vadd.f32 %v1558, 1.0
    %v1585 = vadd.f32 %v1560, 1.0
    %v1586 = vadd.f32 %v1562, 1.0
    %v1587 = vadd.f32 %v1564, 1.0
    %v1588 = vadd.f32 %v1566, 1.0
    %v1589 = vadd.f32 %v1568, 1.0
    %v1590 = vadd.f32 %v1570, 1.0
    %v1591 = vadd.f32 %v1572, 1.0
    %v1592 = vadd.f32 %v1574, 1.0
    %v1593 = vadd.f32 %v1576, 1.0
    %v1594 = vadd.f32 %v1578, 1.0
    %v1595 = vadd.f32 %v1580, 1.0
    %v1596 = vadd.f32 %v1582, 1.0
    %v1597 = vlog2.pop %v1583
    %v1598 = vmul.f32 %v1597, 0.6931472
    %v1599 = vlog2.pop %v1584
    %v1600 = vmul.f32 %v1599, 0.6931472
    %v1601 = vlog2.pop %v1585
    %v1602 = vmul.f32 %v1601, 0.6931472
    %v1603 = vlog2.pop %v1586
    %v1604 = vmul.f32 %v1603, 0.6931472
    %v1605 = vlog2.pop %v1587
    %v1606 = vmul.f32 %v1605, 0.6931472
    %v1607 = vlog2.pop %v1588
    %v1608 = vmul.f32 %v1607, 0.6931472
    %v1609 = vlog2.pop %v1589
    %v1610 = vmul.f32 %v1609, 0.6931472
    %v1611 = vlog2.pop %v1590
    %v1612 = vmul.f32 %v1611, 0.6931472
    %v1613 = vlog2.pop %v1591
    %v1614 = vmul.f32 %v1613, 0.6931472
    %v1615 = vlog2.pop %v1592
    %v1616 = vmul.f32 %v1615, 0.6931472
    %v1617 = vlog2.pop %v1593
    %v1618 = vmul.f32 %v1617, 0.6931472
    %v1619 = vlog2.pop %v1594
    %v1620 = vmul.f32 %v1619, 0.6931472
    %v1621 = vlog2.pop %v1595
    %v1622 = vmul.f32 %v1621, 0.6931472
    %v1623 = vlog2.pop %v1596
    %v1624 = vmul.f32 %v1623, 0.6931472
    %v1625 = vsub.f32 %v1513, %v1598
    %v1626 = vsub.f32 %v1514, %v1600
    %v1627 = vsub.f32 %v1515, %v1602
    %v1628 = vsub.f32 %v1516, %v1604
    %v1629 = vsub.f32 %v1517, %v1606
    %v1630 = vsub.f32 %v1518, %v1608
    %v1631 = vsub.f32 %v1519, %v1610
    %v1632 = vsub.f32 %v1520, %v1612
    %v1633 = vsub.f32 %v1521, %v1614
    %v1634 = vsub.f32 %v1522, %v1616
    %v1635 = vsub.f32 %v1523, %v1618
    %v1636 = vsub.f32 %v1524, %v1620
    %v1637 = vsub.f32 %v1525, %v1622
    %v1638 = vsub.f32 %v1526, %v1624
    %v1639 = vsub.f32 1.0, %v55
    %v1640 = vsub.f32 1.0, %v56
    %v1641 = vsub.f32 1.0, %v57
    %v1642 = vsub.f32 1.0, %v58
    %v1643 = vsub.f32 1.0, %v59
    %v1644 = vsub.f32 1.0, %v60
    %v1645 = vsub.f32 1.0, %v61
    %v1646 = vsub.f32 1.0, %v62
    %v1647 = vsub.f32 1.0, %v63
    %v1648 = vsub.f32 1.0, %v64
    %v1649 = vsub.f32 1.0, %v65
    %v1650 = vsub.f32 1.0, %v66
    %v1651 = vsub.f32 1.0, %v67
    %v1652 = vsub.f32 1.0, %v68
    %v1653 = vmul.f32 %v1639, %v1378
    %v1654 = vmul.f32 %v1640, %v1380
    %v1655 = vmul.f32 %v1641, %v1421
    %v1656 = vmul.f32 %v1642, %v1423
    %v1657 = vmul.f32 %v1643, %v1464
    %v1658 = vmul.f32 %v1644, %v1466
    %v1659 = vmul.f32 %v1645, %v1507
    %v1660 = vmul.f32 %v1646, %v1382
    %v1661 = vmul.f32 %v1647, %v1384
    %v1662 = vmul.f32 %v1648, %v1425
    %v1663 = vmul.f32 %v1649, %v1427
    %v1664 = vmul.f32 %v1650, %v1468
    %v1665 = vmul.f32 %v1651, %v1470
    %v1666 = vmul.f32 %v1652, %v1510
    %v1667 = vsub.f32 %v1625, %v1653
    %v1668 = vsub.f32 %v1626, %v1654
    %v1669 = vsub.f32 %v1627, %v1655
    %v1670 = vsub.f32 %v1628, %v1656
    %v1671 = vsub.f32 %v1629, %v1657
    %v1672 = vsub.f32 %v1630, %v1658
    %v1673 = vsub.f32 %v1631, %v1659
    %v1674 = vsub.f32 %v1632, %v1660
    %v1675 = vsub.f32 %v1633, %v1661
    %v1676 = vsub.f32 %v1634, %v1662
    %v1677 = vsub.f32 %v1635, %v1663
    %v1678 = vsub.f32 %v1636, %v1664
    %v1679 = vsub.f32 %v1637, %v1665
    %v1680 = vsub.f32 %v1638, %v1666
    %v1681 = vmul.f32 %v825, %v825
    %v1682 = vmul.f32 %v826, %v826
    %v1683 = vlaneseq
    %v1684 = vand.u32 %v1683, 127
    %vm1685 = vcmp.lt.s32.totalorder %v1684, 8
    %v1686 = vsel %vm1685, 1, 0
    %v1687 = vcvt.s32.f32 %v1686
    %v1688 = vmul.f32 %v817, %v817
    %v1689 = vmul.f32 %v821, %v821
    %v1690 = vadd.f32 %v1681, %v1688
    %v1691 = vadd.f32 %v1682, %v1689
    %v1692 = vsub.f32 %v1690, 1.0
    %v1693 = vsub.f32 %v1691, 1.0
    %v1694 = vadd.f32 %v1681, 1e-06
    %v1695 = vadd.f32 %v1682, 1e-06
    %v1696 = vlog2.pop %v1694
    %v1697 = vmul.f32 %v1696, 0.6931472
    %v1698 = vlog2.pop %v1695
    %v1699 = vmul.f32 %v1698, 0.6931472
    %v1700 = vsub.f32 %v1692, %v1697
    %v1701 = vsub.f32 %v1693, %v1699
    %v1702 = vmul.f32 %v1700, %v1687
    %v1703 = vmul.f32 %v1701, %v1687
    %v1704 = vld [vmem:[#allocation2] sm:$0x7f]
    %v1705 = vadd.f32 %v1667, %v1674
    %v1706 = vrot.slane %v1705, 4
    %v1707 = vadd.f32 %v1705, %v1706
    %v1708 = vrot.slane %v1707, 2
    %v1709 = vadd.f32 %v1707, %v1708
    %v1710 = vrot.slane %v1709, 1
    %v1711 = vadd.f32 %v1709, %v1710
    %v1712 = vadd.f32 %v1668, %v1675
    %v1713 = vrot.slane %v1712, 4
    %v1714 = vadd.f32 %v1712, %v1713
    %v1715 = vrot.slane %v1714, 2
    %v1716 = vadd.f32 %v1714, %v1715
    %v1717 = vrot.slane %v1716, 1
    %v1718 = vadd.f32 %v1716, %v1717
    %v1719 = vadd.f32 %v1669, %v1676
    %v1720 = vrot.slane %v1719, 4
    %v1721 = vadd.f32 %v1719, %v1720
    %v1722 = vrot.slane %v1721, 2
    %v1723 = vadd.f32 %v1721, %v1722
    %v1724 = vrot.slane %v1723, 1
    %v1725 = vadd.f32 %v1723, %v1724
    %v1726 = vadd.f32 %v1670, %v1677
    %v1727 = vrot.slane %v1726, 4
    %v1728 = vadd.f32 %v1726, %v1727
    %v1729 = vrot.slane %v1728, 2
    %v1730 = vadd.f32 %v1728, %v1729
    %v1731 = vrot.slane %v1730, 1
    %v1732 = vadd.f32 %v1730, %v1731
    %v1733 = vadd.f32 %v1671, %v1678
    %v1734 = vrot.slane %v1733, 4
    %v1735 = vadd.f32 %v1733, %v1734
    %v1736 = vrot.slane %v1735, 2
    %v1737 = vadd.f32 %v1735, %v1736
    %v1738 = vrot.slane %v1737, 1
    %v1739 = vadd.f32 %v1737, %v1738
    %v1740 = vadd.f32 %v1672, %v1679
    %v1741 = vrot.slane %v1740, 4
    %v1742 = vadd.f32 %v1740, %v1741
    %v1743 = vrot.slane %v1742, 2
    %v1744 = vadd.f32 %v1742, %v1743
    %v1745 = vrot.slane %v1744, 1
    %v1746 = vadd.f32 %v1744, %v1745
    %v1747 = vsel %vm503, %v1673, 0.0
    %v1748 = vsel %vm503, %v1680, 0.0
    %v1749 = vadd.f32 %v1747, %v1748
    %v1750 = vrot.slane %v1749, 4
    %v1751 = vadd.f32 %v1749, %v1750
    %v1752 = vrot.slane %v1751, 2
    %v1753 = vadd.f32 %v1751, %v1752
    %v1754 = vrot.slane %v1753, 1
    %v1755 = vadd.f32 %v1753, %v1754
    %v1763 = vcombine.low %v1711, %v1718
    %v1764 = vcombine.low %v1725, %v1732
    %v1765 = vcombine.low %v1739, %v1746
    %v1767 = vunpack.c.l.s4 1966171168
    %v1768 = vunpack.c.0.s8 %v1767
    %v1769 = vlaneseq
    %v1770 = vshrl.u32 %v1769, 7
    %v1771 = vsub.s32 %v1768, %v1770
    %v1772 = vrot.slane %v1763, %v1771
    %v1774 = vunpack.c.l.s4 1966171168
    %v1775 = vunpack.c.0.s8 %v1774
    %v1776 = vlaneseq
    %v1777 = vshrl.u32 %v1776, 7
    %v1778 = vsub.s32 %v1775, %v1777
    %v1779 = vrot.slane %v1764, %v1778
    %v1781 = vunpack.c.l.s4 1966171168
    %v1782 = vunpack.c.0.s8 %v1781
    %v1783 = vlaneseq
    %v1784 = vshrl.u32 %v1783, 7
    %v1785 = vsub.s32 %v1782, %v1784
    %v1786 = vrot.slane %v1765, %v1785
    %v1788 = vunpack.c.l.s4 1966171168
    %v1789 = vunpack.c.0.s8 %v1788
    %v1790 = vlaneseq
    %v1791 = vshrl.u32 %v1790, 7
    %v1792 = vsub.s32 %v1789, %v1791
    %v1793 = vrot.slane %v1755, %v1792
    %v1794 = vcombine.low %v1772, %v1779
    %v1795 = vcombine.low %v1786, %v1793
    %v1797 = vunpack.c.l.s4 1966171168
    %v1798 = vunpack.c.0.s8 %v1797
    %v1799 = vlaneseq
    %v1800 = vshrl.u32 %v1799, 7
    %v1801 = vsub.s32 %v1798, %v1800
    %v1802 = vrot.slane %v1794, %v1801
    %v1804 = vunpack.c.l.s4 1966171168
    %v1805 = vunpack.c.0.s8 %v1804
    %v1806 = vlaneseq
    %v1807 = vshrl.u32 %v1806, 7
    %v1808 = vsub.s32 %v1805, %v1807
    %v1809 = vrot.slane %v1795, %v1808
    %v1810 = vcombine.low %v1802, %v1809
    %v1812 = vadd.f32 %v1704, %v1810
    %v1813 = vlaneseq
    %vm1814 = vcmp.ge.s32.totalorder %v1813, 0
    %vm1815 = vcmp.lt.s32.totalorder %v1813, 784
    %vm1816 = vmand %vm1814, %vm1815
    %1817 = vst.msk [vmem:[#allocation2] sm:$0x7f] %vm1816, %v1812
    %v1818 = vld [vmem:[#allocation3] sm:$0x1]
    %v1819 = vadd.f32 %v1702, %v1703
    %v1820 = vrot.slane %v1819, 4
    %v1821 = vadd.f32 %v1819, %v1820
    %v1822 = vrot.slane %v1821, 2
    %v1823 = vadd.f32 %v1821, %v1822
    %v1824 = vrot.slane %v1823, 1
    %v1825 = vadd.f32 %v1823, %v1824
    %v1826 = vadd.f32 %v1818, %v1825
    %1827 = vst [vmem:[#allocation3] sm:$0x1] %v1826
    // Predicated region
    $region46: #{tpu_custom_call.1} parent=1 // pred_check
      %p1828 = pneg %p37
    $region47: #{tpu_custom_call.1} parent=1 // pred_check_branch
      %1830 = sbr.rel (%p1828) target = $region49
    $region48: #{tpu_custom_call.1} parent=1 // pred_region
      %v1831 = vld [vmem:[#allocation2] sm:$0x7f]
      %v1833 = vlaneseq
      %v1834 = vshrl.u32 %v1833, 7
      %v1835 = vsub.s32 0, %v1834
      %v1836 = vrot.slane %v1831, %v1835
      %v1837 = vlaneseq
      %v1838 = vshrl.u32 %v1837, 7
      %v1839 = vsub.s32 1, %v1838
      %v1840 = vrot.slane %v1831, %v1839
      %v1841 = vlaneseq
      %v1842 = vshrl.u32 %v1841, 7
      %v1843 = vsub.s32 2, %v1842
      %v1844 = vrot.slane %v1831, %v1843
      %v1845 = vlaneseq
      %v1846 = vshrl.u32 %v1845, 7
      %v1847 = vsub.s32 3, %v1846
      %v1848 = vrot.slane %v1831, %v1847
      %v1849 = vlaneseq
      %v1850 = vshrl.u32 %v1849, 7
      %v1851 = vsub.s32 4, %v1850
      %v1852 = vrot.slane %v1831, %v1851
      %v1853 = vlaneseq
      %v1854 = vshrl.u32 %v1853, 7
      %v1855 = vsub.s32 5, %v1854
      %v1856 = vrot.slane %v1831, %v1855
      %v1857 = vlaneseq
      %v1858 = vshrl.u32 %v1857, 7
      %v1859 = vsub.s32 6, %v1858
      %v1860 = vrot.slane %v1831, %v1859
      %vm1868 = vcmask 1040384
      %v1869 = vsel %vm1868, %v1836, 0.0
      %v1870 = vsel %vm1868, %v1840, 0.0
      %v1871 = vadd.f32 %v1869, %v1870
      %v1872 = vsel %vm1868, %v1844, 0.0
      %v1873 = vadd.f32 %v1871, %v1872
      %v1874 = vsel %vm1868, %v1848, 0.0
      %v1875 = vadd.f32 %v1873, %v1874
      %v1876 = vsel %vm1868, %v1852, 0.0
      %v1877 = vadd.f32 %v1875, %v1876
      %v1878 = vsel %vm1868, %v1856, 0.0
      %v1879 = vadd.f32 %v1877, %v1878
      %vm1880 = vcmask 122880
      %v1881 = vsel %vm1880, %v1860, 0.0
      %v1882 = vadd.f32 %v1879, %v1881
      %1883 = vadd.xlane.f32.xlu0 %v1882
      %v1884 = vpop.xlane.xlu0 %1883
      %v1885 = vrot.slane %v1884, 4
      %v1886 = vadd.f32 %v1884, %v1885
      %v1887 = vrot.slane %v1886, 2
      %v1888 = vadd.f32 %v1886, %v1887
      %v1889 = vrot.slane %v1888, 1
      %v1890 = vadd.f32 %v1888, %v1889
      %s1891 = vtos %v1890
      %s1892 = ssub.f32 0.0, %s1891
      %v1893 = vld [vmem:[#allocation3] sm:$0x1]
      %v1894 = vsel %vm1868, %v1893, 0.0
      %1895 = vadd.xlane.f32.xlu0 %v1894
      %v1896 = vpop.xlane.xlu0 %1895
      %v1897 = vrot.slane %v1896, 4
      %v1898 = vadd.f32 %v1896, %v1897
      %v1899 = vrot.slane %v1898, 2
      %v1900 = vadd.f32 %v1898, %v1899
      %v1901 = vrot.slane %v1900, 1
      %v1902 = vadd.f32 %v1900, %v1901
      %s1903 = vtos %v1902
      %s1904 = smul.f32 %s1903, 0.5
      %s1905 = sadd.f32 %s1892, %s1904
      %s1906 = smul.f32 %s1905, 0.0625
      %v1907 = vstv %s1906
      %vm1908 = vcmask 0
      %1909 = vst.msk [vmem:[#allocation4] sm:$0x1] %vm1908, %v1907
    $region49: #{tpu_custom_call.1} parent=1 // pred_fallthru
      _
    // Predicated region
    $region50: #{tpu_custom_call.1} parent=1 // pred_check
      _
    $region51: #{tpu_custom_call.1} parent=1 // pred_check_branch
      %1911 = sbr.rel (0) target = $region53
    $region52: #{tpu_custom_call.1} parent=1 // pred_region
      %s1913 = ssub.s32 16, 16
      %1914 = vsyncadd [#allocation5], %s1913
      %s1916 = sshll.u32 [#allocation4], 4
      %s1917 = int_to_ptr.vmem [resolvable:$true] %s1916
      %1919 = dma.vmem_to_hbm [thread:$0]  %s1917, 16, %s10, [#allocation5]
    $region53: #{tpu_custom_call.1} parent=1 // pred_fallthru
      _
    // Predicated region
    $region54: #{tpu_custom_call.1} parent=1 // pred_check
      _
    $region55: #{tpu_custom_call.1} parent=1 // pred_check_branch
      %1921 = sbr.rel (0) target = $region57
    $region56: #{tpu_custom_call.1} parent=1 // pred_region
      %1922 = dma.done [#allocation5], 16
    $region57: #{tpu_custom_call.1} parent=1 // pred_fallthru
      _
    %1923 = vsyncpa [#allocation5], 1

</llo_original>
